<compile_context>
chip_gen: v7x
topology: tpu7x:2x2x1
jax: 0.10.0
libtpu: 0.0.40
codegen_flags: <defaults>
</compile_context>

<pallas_src>
import jax
import jax.numpy as jnp
from jax.experimental import pallas as pl
from jax.experimental.pallas import tpu as pltpu

_LANE = 128
_SUBLANE = 8


def _round_up(a, b):
    return (a + b - 1) // b * b


def _make_head_kernel(out_dims_padded):
    """Kernel factory closing over the static, lane-padded layer widths."""
    offsets = []
    off = 0
    for d in out_dims_padded:
        offsets.append(off)
        off += d
    num_layers = len(out_dims_padded)

    def kernel(x_ref, *refs):
        # refs = (w0_expanded, w1, ..., w_cls, bias_packed, out)
        out_ref = refs[-1]
        bias_ref = refs[-2]
        w_refs = refs[:-2]

        # x arrives flattened as [TILE_N, C*HW] f32 (its stored dtype; no
        # wrapper cast pass).  The global average pool is folded into W0, so
        # layer 0 below performs pool + linear in one MXU matmul with f32
        # accumulation (also fixes the v5e bf16-accumulation concern).
        h = x_ref[...]

        for li in range(num_layers):
            w = w_refs[li][...]
            d = out_dims_padded[li]
            b = bias_ref[:, offsets[li]:offsets[li] + d]   # f32 (keeps -1e30 pad)
            h = jnp.dot(h.astype(w.dtype), w,
                        preferred_element_type=jnp.float32) + b
            if li < num_layers - 1:
                h = jnp.maximum(h, 0.0)     # ReLU; Dropout = identity at eval

        # Softmax over the lane-dense padded class dim.  Padded classifier
        # columns carry a -1e30 f32 bias -> exp() underflows to exactly 0.
        m = jnp.max(h, axis=-1, keepdims=True)
        e = jnp.exp(h - m)
        denom = jnp.sum(e, axis=-1, keepdims=True)
        inv = pl.reciprocal(denom, approx=True)            # EUP slot
        inv = inv * (2.0 - denom * inv)                    # Newton step (f32 acc)
        out_ref[...] = (e * inv).astype(out_ref.dtype)

    return kernel


def _pack_head_params(params, hw, compute_dtype):
    """Pad layer widths to multiples of 128, fold the 1/(H*W) average pool into
    an HW-replicated W0, and pack all biases into one lane-dense f32 row."""
    ws, bs, dims = [], [], []
    for li, (w, b) in enumerate(params):
        d_in, d_out = w.shape
        d_out_pad = _round_up(d_out, _LANE)
        is_last = li == len(params) - 1

        w = jnp.asarray(w, jnp.float32)
        if li == 0:
            # x is presented flattened [N, C*HW]; replicating each W0 row
            # across HW (scaled by 1/HW) makes layer 0 = avgpool + linear.
            w = jnp.repeat(w * (1.0 / hw), hw, axis=0)     # [C*HW, d_out]
        rows = w.shape[0] if li == 0 else dims[-1]
        w_p = jnp.zeros((rows, d_out_pad), jnp.float32)
        w_p = w_p.at[:w.shape[0], :d_out].set(w)

        pad_val = -1e30 if is_last else 0.0                # kill padded logits
        b_p = jnp.full((1, d_out_pad), pad_val, jnp.float32)
        b_p = b_p.at[:, :d_out].set(jnp.asarray(b, jnp.float32).reshape(1, -1))

        ws.append(w_p.astype(compute_dtype))
        bs.append(b_p)                                     # bias stays f32
        dims.append(d_out_pad)
    return ws, jnp.concatenate(bs, axis=1), dims


def network_head_forward(x_nchw, params, *, compute_dtype=jnp.float32):
    """Fused avg-pool + MLP + softmax head as one batch-tiled Pallas call.

    x_nchw : [N, C, H, W] backbone feature map (f32; DMA'd as stored).
    params : list of (weight [in, out], bias [1, out]); last pair = classifier.
    compute_dtype : MXU operand dtype for the weights / activation casts
                    (f32 default, bf16 optional); accumulation is always f32.
    """
    N, C, H, W = x_nchw.shape
    HW = H * W
    K = C * HW
    num_classes = params[-1][0].shape[1]

    ws, bias_packed, dims_pad = _pack_head_params(params, HW, compute_dtype)
    classes_pad = dims_pad[-1]

    # Metadata-only reshape (NCHW is contiguous): no extra HBM pass.
    x2 = x_nchw.reshape(N, K)
    x_itemsize = jnp.dtype(x2.dtype).itemsize
    w_itemsize = jnp.dtype(compute_dtype).itemsize

    # ---- generation-aware VMEM policy ----
    try:
        vmem_cap = int(pltpu.get_tpu_info().vmem_capacity_bytes)
    except Exception:
        vmem_cap = 64 << 20                                # conservative fallback
    usable = int(vmem_cap * 0.85)                          # headroom (v7x: 64 MiB/TC)

    w_bytes = sum(int(w.size) * w_itemsize for w in ws) + int(bias_packed.size) * 4

    sub = 16 if compute_dtype == jnp.bfloat16 else _SUBLANE
    per_row = 2 * K * x_itemsize + 2 * classes_pad * 4     # dbl-buffered x + out
    avail = usable - w_bytes - (2 << 20)
    tile_budget = max(sub, (max(avail, 0) // per_row) // sub * sub)
    # Keep >= 2 grid steps when N allows it so both v7x TensorCores get work.
    tile_cap = _round_up(pl.cdiv(N, 2), sub)
    tile_n = int(max(sub, min(tile_budget, tile_cap)))
    grid = (pl.cdiv(N, tile_n),)
    n_rows_out = grid[0] * tile_n            # tiny padded-row slab; sliced below

    kernel = _make_head_kernel(tuple(dims_pad))

    def build(single_buffer):
        resident = {"pipeline_mode": pl.Buffered(1)} if single_buffer else {}
        in_specs = [pl.BlockSpec((tile_n, K), lambda i: (i, 0))]
        for w in ws:                                       # weights stay resident
            in_specs.append(pl.BlockSpec(w.shape, lambda i: (0, 0), **resident))
        in_specs.append(pl.BlockSpec(bias_packed.shape, lambda i: (0, 0), **resident))
        out_spec = pl.BlockSpec((tile_n, classes_pad), lambda i: (i, 0))

        w_mult = 1 if single_buffer else 2
        vmem_needed = (w_mult * w_bytes + 2 * tile_n * K * x_itemsize
                       + 2 * tile_n * classes_pad * 4 + (2 << 20))
        vmem_limit = int(min(max(vmem_needed, 4 << 20), usable))

        d_in = K
        mm_flops = 0
        for d_out in dims_pad:
            mm_flops += 2 * d_in * d_out
            d_in = d_out
        flops = N * mm_flops
        transcendentals = N * (classes_pad + 1)
        bytes_accessed = (int(x2.size) * x_itemsize + w_bytes
                          + n_rows_out * classes_pad * 4)

        return pl.pallas_call(
            kernel,
            out_shape=jax.ShapeDtypeStruct((n_rows_out, classes_pad), jnp.float32),
            grid_spec=pltpu.PrefetchScalarGridSpec(
                num_scalar_prefetch=0,
                grid=grid,
                in_specs=in_specs,
                out_specs=out_spec,
            ),
            compiler_params=pltpu.CompilerParams(
                dimension_semantics=("parallel",),
                vmem_limit_bytes=vmem_limit,
            ),
            cost_estimate=pl.CostEstimate(
                flops=int(flops),
                transcendentals=int(transcendentals),
                bytes_accessed=int(bytes_accessed),
            ),
        )

    try:
        out = build(single_buffer=True)(x2, *ws, bias_packed)
    except Exception:
        # pl.Buffered(1) unsupported on this jax build -> default buffering.
        out = build(single_buffer=False)(x2, *ws, bias_packed)

    return out[:N, :num_classes]


def init_head_params(key, input_dim, output_dims, num_classes):
    """nn.Linear-style init: U(-1/sqrt(fan_in), +1/sqrt(fan_in))."""
    params = []
    dims = list(output_dims) + [num_classes]
    in_dim = input_dim
    for out_dim in dims:
        key, kw, kb = jax.random.split(key, 3)
        bound = 1.0 / jnp.sqrt(jnp.float32(in_dim))
        w = jax.random.uniform(kw, (in_dim, out_dim), jnp.float32, -bound, bound)
        b = jax.random.uniform(kb, (1, out_dim), jnp.float32, -bound, bound)
        params.append((w, b))
        in_dim = out_dim
    return params


def reference_forward(x_nchw, params):
    """Pure-JAX reference of the same head."""
    h = jnp.mean(x_nchw, axis=(2, 3))
    for w, b in params[:-1]:
        h = jnp.maximum(jnp.dot(h, w) + b, 0.0)
    w, b = params[-1]
    logits = jnp.dot(h, w) + b
    return jax.nn.softmax(logits, axis=-1)


if __name__ == "__main__":
    # Small shapes consistent with the module:
    #   backbone feature map: N=2, C=input_dim=4, H=W=16
    #   head: output_dims=[32, 16], num_classes=10, dropout identity @ eval
    N, C, H, W = 2, 4, 16, 16
    output_dims = [32, 16]
    num_classes = 10

    key = jax.random.PRNGKey(0)
    key, kx = jax.random.split(key)
    x = jax.random.normal(kx, (N, C, H, W), dtype=jnp.float32)

    params = init_head_params(key, C, output_dims, num_classes)

    out = network_head_forward(x, params)
    out = jax.block_until_ready(out)

    ref = reference_forward(x, params)
    assert out.shape == (N, num_classes)
    assert jnp.allclose(jnp.sum(out, axis=-1), 1.0, atol=1e-4)
    assert jnp.allclose(out, ref, atol=2e-4, rtol=2e-4)

    # bf16 MXU-operand path (x DMA'd as f32, cast in-kernel; f32 accumulation).
    out_bf16 = jax.block_until_ready(
        network_head_forward(x, params, compute_dtype=jnp.bfloat16))
    assert out_bf16.shape == (N, num_classes)
    assert jnp.allclose(jnp.sum(out_bf16, axis=-1), 1.0, atol=1e-3)
    assert jnp.allclose(out_bf16, ref, atol=2e-2, rtol=2e-2)

    print("KERNEL_OK")
</pallas_src>

<mosaic_0001>
module attributes {stable_mosaic.version = 11 : i64} {
  func.func @kernel(%arg0: i32, %arg1: memref<8x1024xf32, #tpu.memory_space<vmem>>, %arg2: memref<1024x128xf32, #tpu.memory_space<vmem>>, %arg3: memref<128x128xf32, #tpu.memory_space<vmem>>, %arg4: memref<128x128xf32, #tpu.memory_space<vmem>>, %arg5: memref<1x384xf32, #tpu.memory_space<vmem>>, %arg6: memref<8x128xf32, #tpu.memory_space<vmem>>) attributes {dimension_semantics = [#tpu.dimension_semantics<parallel>], iteration_bounds = array<i64: 1>, scalar_prefetch = 0 : i64, scratch_operands = 0 : i64, tpu.core_type = #tpu.core_type<tc>, window_params = [{transform_indices = @transform_0, window_bounds = array<i64: 8, 1024>}, {pipeline_mode = #tpu.pipeline_mode<synchronous>, transform_indices = @transform_1, window_bounds = array<i64: 1024, 128>}, {pipeline_mode = #tpu.pipeline_mode<synchronous>, transform_indices = @transform_2, window_bounds = array<i64: 128, 128>}, {pipeline_mode = #tpu.pipeline_mode<synchronous>, transform_indices = @transform_3, window_bounds = array<i64: 128, 128>}, {pipeline_mode = #tpu.pipeline_mode<synchronous>, transform_indices = @transform_4, window_bounds = array<i64: 1, 384>}, {transform_indices = @transform_5, window_bounds = array<i64: 8, 128>}]} {
    %c0 = arith.constant 0 : index
    %c0_0 = arith.constant 0 : index
    %0 = vector.load %arg1[%c0, %c0_0] : memref<8x1024xf32, #tpu.memory_space<vmem>>, vector<8x1024xf32>
    %c0_1 = arith.constant 0 : index
    %c0_2 = arith.constant 0 : index
    %1 = vector.load %arg2[%c0_1, %c0_2] : memref<1024x128xf32, #tpu.memory_space<vmem>>, vector<1024x128xf32>
    %c0_3 = arith.constant 0 : index
    %c0_4 = arith.constant 0 : index
    %2 = vector.load %arg5[%c0_3, %c0_4] : memref<1x384xf32, #tpu.memory_space<vmem>>, vector<1x128xf32>
    %cst = arith.constant dense<0.000000e+00> : vector<8x128xf32>
    %3 = tpu.matmul %0, %1, %cst {dimension_numbers = #tpu.dot_dimension_numbers<[1], [0], [0], [1], [0, 0, 1, 1], [], []>} : vector<8x1024xf32>, vector<1024x128xf32>, vector<8x128xf32> -> vector<8x128xf32>
    %4 = vector.broadcast %2 : vector<1x128xf32> to vector<8x128xf32>
    %5 = arith.addf %3, %4 : vector<8x128xf32>
    %cst_5 = arith.constant 0.000000e+00 : f32
    %6 = vector.broadcast %cst_5 : f32 to vector<8x128xf32>
    %7 = arith.maximumf %5, %6 : vector<8x128xf32>
    %c0_6 = arith.constant 0 : index
    %c0_7 = arith.constant 0 : index
    %8 = vector.load %arg3[%c0_6, %c0_7] : memref<128x128xf32, #tpu.memory_space<vmem>>, vector<128x128xf32>
    %c0_8 = arith.constant 0 : index
    %c128 = arith.constant 128 : index
    %9 = vector.load %arg5[%c0_8, %c128] : memref<1x384xf32, #tpu.memory_space<vmem>>, vector<1x128xf32>
    %cst_9 = arith.constant dense<0.000000e+00> : vector<8x128xf32>
    %10 = tpu.matmul %7, %8, %cst_9 {dimension_numbers = #tpu.dot_dimension_numbers<[1], [0], [0], [1], [0, 0, 1, 1], [], []>} : vector<8x128xf32>, vector<128x128xf32>, vector<8x128xf32> -> vector<8x128xf32>
    %11 = vector.broadcast %9 : vector<1x128xf32> to vector<8x128xf32>
    %12 = arith.addf %10, %11 : vector<8x128xf32>
    %cst_10 = arith.constant 0.000000e+00 : f32
    %13 = vector.broadcast %cst_10 : f32 to vector<8x128xf32>
    %14 = arith.maximumf %12, %13 : vector<8x128xf32>
    %c0_11 = arith.constant 0 : index
    %c0_12 = arith.constant 0 : index
    %15 = vector.load %arg4[%c0_11, %c0_12] : memref<128x128xf32, #tpu.memory_space<vmem>>, vector<128x128xf32>
    %c0_13 = arith.constant 0 : index
    %c256 = arith.constant 256 : index
    %16 = vector.load %arg5[%c0_13, %c256] : memref<1x384xf32, #tpu.memory_space<vmem>>, vector<1x128xf32>
    %cst_14 = arith.constant dense<0.000000e+00> : vector<8x128xf32>
    %17 = tpu.matmul %14, %15, %cst_14 {dimension_numbers = #tpu.dot_dimension_numbers<[1], [0], [0], [1], [0, 0, 1, 1], [], []>} : vector<8x128xf32>, vector<128x128xf32>, vector<8x128xf32> -> vector<8x128xf32>
    %18 = vector.broadcast %16 : vector<1x128xf32> to vector<8x128xf32>
    %19 = arith.addf %17, %18 : vector<8x128xf32>
    %cst_15 = arith.constant dense<0xFF800000> : vector<8xf32>
    %20 = vector.multi_reduction <maximumf>, %19, %cst_15 [1] : vector<8x128xf32> to vector<8xf32>
    %21 = vector.shape_cast %20 : vector<8xf32> to vector<8x1xf32>
    %22 = vector.broadcast %21 : vector<8x1xf32> to vector<8x128xf32>
    %23 = arith.subf %19, %22 : vector<8x128xf32>
    %24 = math.exp %23 : vector<8x128xf32>
    %cst_16 = arith.constant dense<0.000000e+00> : vector<8xf32>
    %25 = vector.multi_reduction <add>, %24, %cst_16 [1] : vector<8x128xf32> to vector<8xf32>
    %26 = vector.shape_cast %25 : vector<8xf32> to vector<8x1xf32>
    %27 = tpu.reciprocal %26 {approx = true} : vector<8x1xf32> -> vector<8x1xf32>
    %28 = arith.mulf %26, %27 : vector<8x1xf32>
    %cst_17 = arith.constant 2.000000e+00 : f32
    %29 = vector.broadcast %cst_17 : f32 to vector<8x1xf32>
    %30 = arith.subf %29, %28 : vector<8x1xf32>
    %31 = arith.mulf %27, %30 : vector<8x1xf32>
    %32 = vector.broadcast %31 : vector<8x1xf32> to vector<8x128xf32>
    %33 = arith.mulf %24, %32 : vector<8x128xf32>
    %c0_18 = arith.constant 0 : index
    %c0_19 = arith.constant 0 : index
    %34 = vector.load %arg6[%c0_18, %c0_19] : memref<8x128xf32, #tpu.memory_space<vmem>>, vector<8x128xf32>
    tpu.vector_store %arg6[%c0_18, %c0_19], %33 {strides = array<i32>} : memref<8x128xf32, #tpu.memory_space<vmem>>, vector<8x128xf32>,
    return
  }
  func.func @transform_0(%arg0: i32) -> (i32, i32) {
    %c0_i32 = arith.constant 0 : i32
    %c0_i32_0 = arith.constant 0 : i32
    return %arg0, %c0_i32 : i32, i32
  }
  func.func @transform_1(%arg0: i32) -> (i32, i32) {
    %c0_i32 = arith.constant 0 : i32
    %c0_i32_0 = arith.constant 0 : i32
    %c0_i32_1 = arith.constant 0 : i32
    return %c0_i32, %c0_i32_0 : i32, i32
  }
  func.func @transform_2(%arg0: i32) -> (i32, i32) {
    %c0_i32 = arith.constant 0 : i32
    %c0_i32_0 = arith.constant 0 : i32
    %c0_i32_1 = arith.constant 0 : i32
    return %c0_i32, %c0_i32_0 : i32, i32
  }
  func.func @transform_3(%arg0: i32) -> (i32, i32) {
    %c0_i32 = arith.constant 0 : i32
    %c0_i32_0 = arith.constant 0 : i32
    %c0_i32_1 = arith.constant 0 : i32
    return %c0_i32, %c0_i32_0 : i32, i32
  }
  func.func @transform_4(%arg0: i32) -> (i32, i32) {
    %c0_i32 = arith.constant 0 : i32
    %c0_i32_0 = arith.constant 0 : i32
    %c0_i32_1 = arith.constant 0 : i32
    return %c0_i32, %c0_i32_0 : i32, i32
  }
  func.func @transform_5(%arg0: i32) -> (i32, i32) {
    %c0_i32 = arith.constant 0 : i32
    %c0_i32_0 = arith.constant 0 : i32
    return %arg0, %c0_i32 : i32, i32
  }
}

module attributes {stable_mosaic.version = 11 : i64} {
  func.func @kernel(%arg0: i32, %arg1: memref<8x1024xf32, #tpu.memory_space<vmem>>, %arg2: memref<1024x128xf32, #tpu.memory_space<vmem>>, %arg3: memref<128x128xf32, #tpu.memory_space<vmem>>, %arg4: memref<128x128xf32, #tpu.memory_space<vmem>>, %arg5: memref<1x384xf32, #tpu.memory_space<vmem>>, %arg6: memref<8x128xf32, #tpu.memory_space<vmem>>) attributes {dimension_semantics = [#tpu.dimension_semantics<parallel>], iteration_bounds = array<i64: 1>, scalar_prefetch = 0 : i64, scratch_operands = 0 : i64, tpu.core_type = #tpu.core_type<tc>, window_params = [{transform_indices = @transform_0, window_bounds = array<i64: 8, 1024>}, {pipeline_mode = #tpu.pipeline_mode<synchronous>, transform_indices = @transform_1, window_bounds = array<i64: 1024, 128>}, {pipeline_mode = #tpu.pipeline_mode<synchronous>, transform_indices = @transform_2, window_bounds = array<i64: 128, 128>}, {pipeline_mode = #tpu.pipeline_mode<synchronous>, transform_indices = @transform_3, window_bounds = array<i64: 128, 128>}, {pipeline_mode = #tpu.pipeline_mode<synchronous>, transform_indices = @transform_4, window_bounds = array<i64: 1, 384>}, {transform_indices = @transform_5, window_bounds = array<i64: 8, 128>}]} {
    %c0 = arith.constant 0 : index
    %c0_0 = arith.constant 0 : index
    %0 = vector.load %arg1[%c0, %c0_0] : memref<8x1024xf32, #tpu.memory_space<vmem>>, vector<8x1024xf32>
    %c0_1 = arith.constant 0 : index
    %c0_2 = arith.constant 0 : index
    %1 = vector.load %arg2[%c0_1, %c0_2] : memref<1024x128xf32, #tpu.memory_space<vmem>>, vector<1024x128xf32>
    %c0_3 = arith.constant 0 : index
    %c0_4 = arith.constant 0 : index
    %2 = vector.load %arg5[%c0_3, %c0_4] : memref<1x384xf32, #tpu.memory_space<vmem>>, vector<1x128xf32>
    %cst = arith.constant dense<0.000000e+00> : vector<8x128xf32>
    %3 = tpu.matmul %0, %1, %cst {dimension_numbers = #tpu.dot_dimension_numbers<[1], [0], [0], [1], [0, 0, 1, 1], [], []>} : vector<8x1024xf32>, vector<1024x128xf32>, vector<8x128xf32> -> vector<8x128xf32>
    %4 = vector.broadcast %2 : vector<1x128xf32> to vector<8x128xf32>
    %5 = arith.addf %3, %4 : vector<8x128xf32>
    %cst_5 = arith.constant 0.000000e+00 : f32
    %6 = vector.broadcast %cst_5 : f32 to vector<8x128xf32>
    %7 = arith.maximumf %5, %6 : vector<8x128xf32>
    %c0_6 = arith.constant 0 : index
    %c0_7 = arith.constant 0 : index
    %8 = vector.load %arg3[%c0_6, %c0_7] : memref<128x128xf32, #tpu.memory_space<vmem>>, vector<128x128xf32>
    %c0_8 = arith.constant 0 : index
    %c128 = arith.constant 128 : index
    %9 = vector.load %arg5[%c0_8, %c128] : memref<1x384xf32, #tpu.memory_space<vmem>>, vector<1x128xf32>
    %cst_9 = arith.constant dense<0.000000e+00> : vector<8x128xf32>
    %10 = tpu.matmul %7, %8, %cst_9 {dimension_numbers = #tpu.dot_dimension_numbers<[1], [0], [0], [1], [0, 0, 1, 1], [], []>} : vector<8x128xf32>, vector<128x128xf32>, vector<8x128xf32> -> vector<8x128xf32>
    %11 = vector.broadcast %9 : vector<1x128xf32> to vector<8x128xf32>
    %12 = arith.addf %10, %11 : vector<8x128xf32>
    %cst_10 = arith.constant 0.000000e+00 : f32
    %13 = vector.broadcast %cst_10 : f32 to vector<8x128xf32>
    %14 = arith.maximumf %12, %13 : vector<8x128xf32>
    %c0_11 = arith.constant 0 : index
    %c0_12 = arith.constant 0 : index
    %15 = vector.load %arg4[%c0_11, %c0_12] : memref<128x128xf32, #tpu.memory_space<vmem>>, vector<128x128xf32>
    %c0_13 = arith.constant 0 : index
    %c256 = arith.constant 256 : index
    %16 = vector.load %arg5[%c0_13, %c256] : memref<1x384xf32, #tpu.memory_space<vmem>>, vector<1x128xf32>
    %cst_14 = arith.constant dense<0.000000e+00> : vector<8x128xf32>
    %17 = tpu.matmul %14, %15, %cst_14 {dimension_numbers = #tpu.dot_dimension_numbers<[1], [0], [0], [1], [0, 0, 1, 1], [], []>} : vector<8x128xf32>, vector<128x128xf32>, vector<8x128xf32> -> vector<8x128xf32>
    %18 = vector.broadcast %16 : vector<1x128xf32> to vector<8x128xf32>
    %19 = arith.addf %17, %18 : vector<8x128xf32>
    %cst_15 = arith.constant dense<0xFF800000> : vector<8xf32>
    %20 = vector.multi_reduction <maximumf>, %19, %cst_15 [1] : vector<8x128xf32> to vector<8xf32>
    %21 = vector.shape_cast %20 : vector<8xf32> to vector<8x1xf32>
    %22 = vector.broadcast %21 : vector<8x1xf32> to vector<8x128xf32>
    %23 = arith.subf %19, %22 : vector<8x128xf32>
    %24 = math.exp %23 : vector<8x128xf32>
    %cst_16 = arith.constant dense<0.000000e+00> : vector<8xf32>
    %25 = vector.multi_reduction <add>, %24, %cst_16 [1] : vector<8x128xf32> to vector<8xf32>
    %26 = vector.shape_cast %25 : vector<8xf32> to vector<8x1xf32>
    %27 = tpu.reciprocal %26 {approx = true} : vector<8x1xf32> -> vector<8x1xf32>
    %28 = arith.mulf %26, %27 : vector<8x1xf32>
    %cst_17 = arith.constant 2.000000e+00 : f32
    %29 = vector.broadcast %cst_17 : f32 to vector<8x1xf32>
    %30 = arith.subf %29, %28 : vector<8x1xf32>
    %31 = arith.mulf %27, %30 : vector<8x1xf32>
    %32 = vector.broadcast %31 : vector<8x1xf32> to vector<8x128xf32>
    %33 = arith.mulf %24, %32 : vector<8x128xf32>
    %c0_18 = arith.constant 0 : index
    %c0_19 = arith.constant 0 : index
    %34 = vector.load %arg6[%c0_18, %c0_19] : memref<8x128xf32, #tpu.memory_space<vmem>>, vector<8x128xf32>
    tpu.vector_store %arg6[%c0_18, %c0_19], %33 {strides = array<i32>} : memref<8x128xf32, #tpu.memory_space<vmem>>, vector<8x128xf32>,
    return
  }
  func.func @transform_0(%arg0: i32) -> (i32, i32) {
    %c0_i32 = arith.constant 0 : i32
    %c0_i32_0 = arith.constant 0 : i32
    return %arg0, %c0_i32 : i32, i32
  }
  func.func @transform_1(%arg0: i32) -> (i32, i32) {
    %c0_i32 = arith.constant 0 : i32
    %c0_i32_0 = arith.constant 0 : i32
    %c0_i32_1 = arith.constant 0 : i32
    return %c0_i32, %c0_i32_0 : i32, i32
  }
  func.func @transform_2(%arg0: i32) -> (i32, i32) {
    %c0_i32 = arith.constant 0 : i32
    %c0_i32_0 = arith.constant 0 : i32
    %c0_i32_1 = arith.constant 0 : i32
    return %c0_i32, %c0_i32_0 : i32, i32
  }
  func.func @transform_3(%arg0: i32) -> (i32, i32) {
    %c0_i32 = arith.constant 0 : i32
    %c0_i32_0 = arith.constant 0 : i32
    %c0_i32_1 = arith.constant 0 : i32
    return %c0_i32, %c0_i32_0 : i32, i32
  }
  func.func @transform_4(%arg0: i32) -> (i32, i32) {
    %c0_i32 = arith.constant 0 : i32
    %c0_i32_0 = arith.constant 0 : i32
    %c0_i32_1 = arith.constant 0 : i32
    return %c0_i32, %c0_i32_0 : i32, i32
  }
  func.func @transform_5(%arg0: i32) -> (i32, i32) {
    %c0_i32 = arith.constant 0 : i32
    %c0_i32_0 = arith.constant 0 : i32
    return %arg0, %c0_i32 : i32, i32
  }
}

</mosaic_0001>

<llo_original>
// kernel: tpu_custom_call.1
$region0: #{tpu_custom_call.1}
  #allocation0 [shape = 'u32[]', space=smem, size = 0x4, offset = 0x4, fixed_abs, tag = 'smem constant byte address 0x4 - core index']
  #allocation1 [shape = 'u32[144,128]{1,0:T(1,128)}', space=vmem, size = 0x12000, scoped, tag = 'internal scratch']
  %s0 = inlined_call_operand.hbm [shape: f32[2,1024], index: 0, kind: input, shape index: {}]
  %s1 = inlined_call_operand.hbm [shape: f32[1024,128], index: 1, kind: input, shape index: {}]
  %s2 = inlined_call_operand.hbm [shape: f32[128,128], index: 2, kind: input, shape index: {}]
  %s3 = inlined_call_operand.hbm [shape: f32[128,128], index: 3, kind: input, shape index: {}]
  %s4 = inlined_call_operand.vmem [shape: f32[1,384], index: 4, kind: input, shape index: {}]
  %s5 = inlined_call_operand.hbm [shape: f32[8,128], index: 5, kind: output, shape index: {}]
  %s6 = sld [smem:[#allocation0]]
  $region46: #{tpu_custom_call.1} parent=0
    _
  %s8 = ssub.s32 1, %s6
  %s9 = scalar_select 0, %s8, %s6
  $region1: #{tpu_custom_call.1} parent=0
    #allocation2 [shape = 'u8[32768]{0}', space=vmem, size = 0x8000, scoped, tag = 'input window, operand 0, single buffered']
    #allocation3 [shape = 's32[1]{0}', space=sflag, size = 0x4, scoped, tag = 'scoped memory for tpu_custom_call.1']
    #allocation4 [shape = 's32[1]{0}', space=sflag, size = 0x4, scoped, tag = 'scoped memory for tpu_custom_call.1']
    #allocation5 [shape = 'u8[524288]{0}', space=vmem, size = 0x80000, scoped, tag = 'input window, operand 1, single buffered']
    #allocation6 [shape = 's32[1]{0}', space=sflag, size = 0x4, scoped, tag = 'scoped memory for tpu_custom_call.1']
    #allocation7 [shape = 'u8[65536]{0}', space=vmem, size = 0x10000, scoped, tag = 'input window, operand 2, single buffered']
    #allocation8 [shape = 'u8[65536]{0}', space=vmem, size = 0x10000, scoped, tag = 'input window, operand 3, single buffered']
    #allocation9 [shape = 's32[1]{0}', space=sflag, size = 0x4, scoped, tag = 'scoped memory for tpu_custom_call.1']
    #allocation10 [shape = 'u8[4096]{0}', space=vmem, size = 0x1000, scoped, tag = 'output window, operand 0, single buffered']
    %10 = vsyncpa [#allocation3], 0
    %11 = vsyncpa [#allocation6], 0
    %12 = vsyncpa [#allocation9], 0
    %13 = vsyncpa [#allocation4], 0
    // Predicated region
    $region2: #{tpu_custom_call.1} parent=1 // pred_check
      _
    $region3: #{tpu_custom_call.1} parent=1 // pred_check_branch
      %15 = sbr.rel (0) target = $region5
    $region4: #{tpu_custom_call.1} parent=1 // pred_region
      %s17 = ssub.s32 1024, 256
      %18 = vsyncadd [#allocation3], %s17
      %s19 = sshll.u32 [#allocation2], 4
      %s20 = int_to_ptr.vmem [resolvable:$true] %s19
      %25 = dma.hbm_to_vmem [thread:$0]  %s0, 256, %s20, [#allocation3], 256, 256, 16
    $region5: #{tpu_custom_call.1} parent=1 // pred_fallthru
      _
    // Predicated region
    $region6: #{tpu_custom_call.1} parent=1 // pred_check
      _
    $region7: #{tpu_custom_call.1} parent=1 // pred_check_branch
      %27 = sbr.rel (0) target = $region9
    $region8: #{tpu_custom_call.1} parent=1 // pred_region
      %s29 = ssub.s32 16384, 16384
      %30 = vsyncadd [#allocation6], %s29
      %s31 = sshll.u32 [#allocation5], 4
      %s32 = int_to_ptr.vmem [resolvable:$true] %s31
      %37 = dma.hbm_to_vmem [thread:$0]  %s1, 16384, %s32, [#allocation6], 128, 128, 8
    $region9: #{tpu_custom_call.1} parent=1 // pred_fallthru
      _
    // Predicated region
    $region10: #{tpu_custom_call.1} parent=1 // pred_check
      _
    $region11: #{tpu_custom_call.1} parent=1 // pred_check_branch
      %39 = sbr.rel (0) target = $region13
    $region12: #{tpu_custom_call.1} parent=1 // pred_region
      %s41 = ssub.s32 2048, 2048
      %42 = vsyncadd [#allocation6], %s41
      %s43 = sshll.u32 [#allocation7], 4
      %s44 = int_to_ptr.vmem [resolvable:$true] %s43
      %49 = dma.hbm_to_vmem [thread:$0]  %s2, 2048, %s44, [#allocation6], 128, 128, 8
    $region13: #{tpu_custom_call.1} parent=1 // pred_fallthru
      _
    // Predicated region
    $region14: #{tpu_custom_call.1} parent=1 // pred_check
      _
    $region15: #{tpu_custom_call.1} parent=1 // pred_check_branch
      %51 = sbr.rel (0) target = $region17
    $region16: #{tpu_custom_call.1} parent=1 // pred_region
      %s53 = ssub.s32 2048, 2048
      %54 = vsyncadd [#allocation9], %s53
      %s55 = sshll.u32 [#allocation8], 4
      %s56 = int_to_ptr.vmem [resolvable:$true] %s55
      %61 = dma.hbm_to_vmem [thread:$0]  %s3, 2048, %s56, [#allocation9], 128, 128, 8
    $region17: #{tpu_custom_call.1} parent=1 // pred_fallthru
      _
    // Predicated region
    $region18: #{tpu_custom_call.1} parent=1 // pred_check
      _
    $region19: #{tpu_custom_call.1} parent=1 // pred_check_branch
      %63 = sbr.rel (0) target = $region21
    $region20: #{tpu_custom_call.1} parent=1 // pred_region
      _
    $region21: #{tpu_custom_call.1} parent=1 // pred_fallthru
      _
    // Predicated region
    $region22: #{tpu_custom_call.1} parent=1 // pred_check
      _
    $region23: #{tpu_custom_call.1} parent=1 // pred_check_branch
      %65 = sbr.rel (0) target = $region25
    $region24: #{tpu_custom_call.1} parent=1 // pred_region
      %66 = dma.done [#allocation3], 1024
    $region25: #{tpu_custom_call.1} parent=1 // pred_fallthru
      _
    // Predicated region
    $region26: #{tpu_custom_call.1} parent=1 // pred_check
      _
    $region27: #{tpu_custom_call.1} parent=1 // pred_check_branch
      %68 = sbr.rel (0) target = $region29
    $region28: #{tpu_custom_call.1} parent=1 // pred_region
      %69 = dma.done [#allocation6], 16384
    $region29: #{tpu_custom_call.1} parent=1 // pred_fallthru
      _
    // Predicated region
    $region30: #{tpu_custom_call.1} parent=1 // pred_check
      _
    $region31: #{tpu_custom_call.1} parent=1 // pred_check_branch
      %71 = sbr.rel (0) target = $region33
    $region32: #{tpu_custom_call.1} parent=1 // pred_region
      %72 = dma.done [#allocation6], 2048
    $region33: #{tpu_custom_call.1} parent=1 // pred_fallthru
      _
    // Predicated region
    $region34: #{tpu_custom_call.1} parent=1 // pred_check
      _
    $region35: #{tpu_custom_call.1} parent=1 // pred_check_branch
      %74 = sbr.rel (0) target = $region37
    $region36: #{tpu_custom_call.1} parent=1 // pred_region
      %75 = dma.done [#allocation9], 2048
    $region37: #{tpu_custom_call.1} parent=1 // pred_fallthru
      _
    %v76 = vld [vmem:[#allocation2] sm:$0xff]
    %v77 = vld [vmem:[#allocation2 + $0x8] sm:$0xff]
    %v78 = vld [vmem:[#allocation2 + $0x10] sm:$0xff]
    %v79 = vld [vmem:[#allocation2 + $0x18] sm:$0xff]
    %v80 = vld [vmem:[#allocation2 + $0x20] sm:$0xff]
    %v81 = vld [vmem:[#allocation2 + $0x28] sm:$0xff]
    %v82 = vld [vmem:[#allocation2 + $0x30] sm:$0xff]
    %v83 = vld [vmem:[#allocation2 + $0x38] sm:$0xff]
    %v84 = vld [vmem:[#allocation5] sm:$0xff]
    %v85 = vld [vmem:[#allocation5 + $0x8] sm:$0xff]
    %v86 = vld [vmem:[#allocation5 + $0x10] sm:$0xff]
    %v87 = vld [vmem:[#allocation5 + $0x18] sm:$0xff]
    %v88 = vld [vmem:[#allocation5 + $0x20] sm:$0xff]
    %v89 = vld [vmem:[#allocation5 + $0x28] sm:$0xff]
    %v90 = vld [vmem:[#allocation5 + $0x30] sm:$0xff]
    %v91 = vld [vmem:[#allocation5 + $0x38] sm:$0xff]
    %v92 = vld [vmem:[#allocation5 + $0x40] sm:$0xff]
    %v93 = vld [vmem:[#allocation5 + $0x48] sm:$0xff]
    %v94 = vld [vmem:[#allocation5 + $0x50] sm:$0xff]
    %v95 = vld [vmem:[#allocation5 + $0x58] sm:$0xff]
    %v96 = vld [vmem:[#allocation5 + $0x60] sm:$0xff]
    %v97 = vld [vmem:[#allocation5 + $0x68] sm:$0xff]
    %v98 = vld [vmem:[#allocation5 + $0x70] sm:$0xff]
    %v99 = vld [vmem:[#allocation5 + $0x78] sm:$0xff]
    %v100 = vld [vmem:[#allocation5 + $0x80] sm:$0xff]
    %v101 = vld [vmem:[#allocation5 + $0x88] sm:$0xff]
    %v102 = vld [vmem:[#allocation5 + $0x90] sm:$0xff]
    %v103 = vld [vmem:[#allocation5 + $0x98] sm:$0xff]
    %v104 = vld [vmem:[#allocation5 + $0xa0] sm:$0xff]
    %v105 = vld [vmem:[#allocation5 + $0xa8] sm:$0xff]
    %v106 = vld [vmem:[#allocation5 + $0xb0] sm:$0xff]
    %v107 = vld [vmem:[#allocation5 + $0xb8] sm:$0xff]
    %v108 = vld [vmem:[#allocation5 + $0xc0] sm:$0xff]
    %v109 = vld [vmem:[#allocation5 + $0xc8] sm:$0xff]
    %v110 = vld [vmem:[#allocation5 + $0xd0] sm:$0xff]
    %v111 = vld [vmem:[#allocation5 + $0xd8] sm:$0xff]
    %v112 = vld [vmem:[#allocation5 + $0xe0] sm:$0xff]
    %v113 = vld [vmem:[#allocation5 + $0xe8] sm:$0xff]
    %v114 = vld [vmem:[#allocation5 + $0xf0] sm:$0xff]
    %v115 = vld [vmem:[#allocation5 + $0xf8] sm:$0xff]
    %v116 = vld [vmem:[#allocation5 + $0x100] sm:$0xff]
    %v117 = vld [vmem:[#allocation5 + $0x108] sm:$0xff]
    %v118 = vld [vmem:[#allocation5 + $0x110] sm:$0xff]
    %v119 = vld [vmem:[#allocation5 + $0x118] sm:$0xff]
    %v120 = vld [vmem:[#allocation5 + $0x120] sm:$0xff]
    %v121 = vld [vmem:[#allocation5 + $0x128] sm:$0xff]
    %v122 = vld [vmem:[#allocation5 + $0x130] sm:$0xff]
    %v123 = vld [vmem:[#allocation5 + $0x138] sm:$0xff]
    %v124 = vld [vmem:[#allocation5 + $0x140] sm:$0xff]
    %v125 = vld [vmem:[#allocation5 + $0x148] sm:$0xff]
    %v126 = vld [vmem:[#allocation5 + $0x150] sm:$0xff]
    %v127 = vld [vmem:[#allocation5 + $0x158] sm:$0xff]
    %v128 = vld [vmem:[#allocation5 + $0x160] sm:$0xff]
    %v129 = vld [vmem:[#allocation5 + $0x168] sm:$0xff]
    %v130 = vld [vmem:[#allocation5 + $0x170] sm:$0xff]
    %v131 = vld [vmem:[#allocation5 + $0x178] sm:$0xff]
    %v132 = vld [vmem:[#allocation5 + $0x180] sm:$0xff]
    %v133 = vld [vmem:[#allocation5 + $0x188] sm:$0xff]
    %v134 = vld [vmem:[#allocation5 + $0x190] sm:$0xff]
    %v135 = vld [vmem:[#allocation5 + $0x198] sm:$0xff]
    %v136 = vld [vmem:[#allocation5 + $0x1a0] sm:$0xff]
    %v137 = vld [vmem:[#allocation5 + $0x1a8] sm:$0xff]
    %v138 = vld [vmem:[#allocation5 + $0x1b0] sm:$0xff]
    %v139 = vld [vmem:[#allocation5 + $0x1b8] sm:$0xff]
    %v140 = vld [vmem:[#allocation5 + $0x1c0] sm:$0xff]
    %v141 = vld [vmem:[#allocation5 + $0x1c8] sm:$0xff]
    %v142 = vld [vmem:[#allocation5 + $0x1d0] sm:$0xff]
    %v143 = vld [vmem:[#allocation5 + $0x1d8] sm:$0xff]
    %v144 = vld [vmem:[#allocation5 + $0x1e0] sm:$0xff]
    %v145 = vld [vmem:[#allocation5 + $0x1e8] sm:$0xff]
    %v146 = vld [vmem:[#allocation5 + $0x1f0] sm:$0xff]
    %v147 = vld [vmem:[#allocation5 + $0x1f8] sm:$0xff]
    %v148 = vld [vmem:[#allocation5 + $0x200] sm:$0xff]
    %v149 = vld [vmem:[#allocation5 + $0x208] sm:$0xff]
    %v150 = vld [vmem:[#allocation5 + $0x210] sm:$0xff]
    %v151 = vld [vmem:[#allocation5 + $0x218] sm:$0xff]
    %v152 = vld [vmem:[#allocation5 + $0x220] sm:$0xff]
    %v153 = vld [vmem:[#allocation5 + $0x228] sm:$0xff]
    %v154 = vld [vmem:[#allocation5 + $0x230] sm:$0xff]
    %v155 = vld [vmem:[#allocation5 + $0x238] sm:$0xff]
    %v156 = vld [vmem:[#allocation5 + $0x240] sm:$0xff]
    %v157 = vld [vmem:[#allocation5 + $0x248] sm:$0xff]
    %v158 = vld [vmem:[#allocation5 + $0x250] sm:$0xff]
    %v159 = vld [vmem:[#allocation5 + $0x258] sm:$0xff]
    %v160 = vld [vmem:[#allocation5 + $0x260] sm:$0xff]
    %v161 = vld [vmem:[#allocation5 + $0x268] sm:$0xff]
    %v162 = vld [vmem:[#allocation5 + $0x270] sm:$0xff]
    %v163 = vld [vmem:[#allocation5 + $0x278] sm:$0xff]
    %v164 = vld [vmem:[#allocation5 + $0x280] sm:$0xff]
    %v165 = vld [vmem:[#allocation5 + $0x288] sm:$0xff]
    %v166 = vld [vmem:[#allocation5 + $0x290] sm:$0xff]
    %v167 = vld [vmem:[#allocation5 + $0x298] sm:$0xff]
    %v168 = vld [vmem:[#allocation5 + $0x2a0] sm:$0xff]
    %v169 = vld [vmem:[#allocation5 + $0x2a8] sm:$0xff]
    %v170 = vld [vmem:[#allocation5 + $0x2b0] sm:$0xff]
    %v171 = vld [vmem:[#allocation5 + $0x2b8] sm:$0xff]
    %v172 = vld [vmem:[#allocation5 + $0x2c0] sm:$0xff]
    %v173 = vld [vmem:[#allocation5 + $0x2c8] sm:$0xff]
    %v174 = vld [vmem:[#allocation5 + $0x2d0] sm:$0xff]
    %v175 = vld [vmem:[#allocation5 + $0x2d8] sm:$0xff]
    %v176 = vld [vmem:[#allocation5 + $0x2e0] sm:$0xff]
    %v177 = vld [vmem:[#allocation5 + $0x2e8] sm:$0xff]
    %v178 = vld [vmem:[#allocation5 + $0x2f0] sm:$0xff]
    %v179 = vld [vmem:[#allocation5 + $0x2f8] sm:$0xff]
    %v180 = vld [vmem:[#allocation5 + $0x300] sm:$0xff]
    %v181 = vld [vmem:[#allocation5 + $0x308] sm:$0xff]
    %v182 = vld [vmem:[#allocation5 + $0x310] sm:$0xff]
    %v183 = vld [vmem:[#allocation5 + $0x318] sm:$0xff]
    %v184 = vld [vmem:[#allocation5 + $0x320] sm:$0xff]
    %v185 = vld [vmem:[#allocation5 + $0x328] sm:$0xff]
    %v186 = vld [vmem:[#allocation5 + $0x330] sm:$0xff]
    %v187 = vld [vmem:[#allocation5 + $0x338] sm:$0xff]
    %v188 = vld [vmem:[#allocation5 + $0x340] sm:$0xff]
    %v189 = vld [vmem:[#allocation5 + $0x348] sm:$0xff]
    %v190 = vld [vmem:[#allocation5 + $0x350] sm:$0xff]
    %v191 = vld [vmem:[#allocation5 + $0x358] sm:$0xff]
    %v192 = vld [vmem:[#allocation5 + $0x360] sm:$0xff]
    %v193 = vld [vmem:[#allocation5 + $0x368] sm:$0xff]
    %v194 = vld [vmem:[#allocation5 + $0x370] sm:$0xff]
    %v195 = vld [vmem:[#allocation5 + $0x378] sm:$0xff]
    %v196 = vld [vmem:[#allocation5 + $0x380] sm:$0xff]
    %v197 = vld [vmem:[#allocation5 + $0x388] sm:$0xff]
    %v198 = vld [vmem:[#allocation5 + $0x390] sm:$0xff]
    %v199 = vld [vmem:[#allocation5 + $0x398] sm:$0xff]
    %v200 = vld [vmem:[#allocation5 + $0x3a0] sm:$0xff]
    %v201 = vld [vmem:[#allocation5 + $0x3a8] sm:$0xff]
    %v202 = vld [vmem:[#allocation5 + $0x3b0] sm:$0xff]
    %v203 = vld [vmem:[#allocation5 + $0x3b8] sm:$0xff]
    %v204 = vld [vmem:[#allocation5 + $0x3c0] sm:$0xff]
    %v205 = vld [vmem:[#allocation5 + $0x3c8] sm:$0xff]
    %v206 = vld [vmem:[#allocation5 + $0x3d0] sm:$0xff]
    %v207 = vld [vmem:[#allocation5 + $0x3d8] sm:$0xff]
    %v208 = vld [vmem:[#allocation5 + $0x3e0] sm:$0xff]
    %v209 = vld [vmem:[#allocation5 + $0x3e8] sm:$0xff]
    %v210 = vld [vmem:[#allocation5 + $0x3f0] sm:$0xff]
    %v211 = vld [vmem:[#allocation5 + $0x3f8] sm:$0xff]
    %v212 = vld [vmem:[%s4] sm:$0x1]
    %v214 = vlaneseq
    %v215 = vshrl.u32 %v214, 7
    %v216 = vsub.s32 0, %v215
    %v217 = vrot.slane %v212, %v216
    %v227 = vcombine.low %v76, %v78
    %v228 = vcombine.high %v76, %v78
    %v229 = vcombine.low %v80, %v82
    %v230 = vcombine.high %v80, %v82
    %v232 = vunpack.c.l.s4 1983009808
    %v233 = vunpack.c.0.s8 %v232
    %v234 = vlaneseq
    %v235 = vshrl.u32 %v234, 7
    %v236 = vsub.s32 %v233, %v235
    %v237 = vrot.slane %v227, %v236
    %v239 = vunpack.c.l.s4 1983009808
    %v240 = vunpack.c.0.s8 %v239
    %v241 = vlaneseq
    %v242 = vshrl.u32 %v241, 7
    %v243 = vsub.s32 %v240, %v242
    %v244 = vrot.slane %v228, %v243
    %v246 = vunpack.c.l.s4 1983009808
    %v247 = vunpack.c.0.s8 %v246
    %v248 = vlaneseq
    %v249 = vshrl.u32 %v248, 7
    %v250 = vsub.s32 %v247, %v249
    %v251 = vrot.slane %v229, %v250
    %v253 = vunpack.c.l.s4 1983009808
    %v254 = vunpack.c.0.s8 %v253
    %v255 = vlaneseq
    %v256 = vshrl.u32 %v255, 7
    %v257 = vsub.s32 %v254, %v256
    %v258 = vrot.slane %v230, %v257
    %v259 = vcombine.low %v237, %v251
    %v260 = vcombine.high %v237, %v251
    %v261 = vcombine.low %v244, %v258
    %v262 = vcombine.high %v244, %v258
    %v263 = vcombine.low %v77, %v79
    %v264 = vcombine.high %v77, %v79
    %v265 = vcombine.low %v81, %v83
    %v266 = vcombine.high %v81, %v83
    %v268 = vunpack.c.l.s4 1983009808
    %v269 = vunpack.c.0.s8 %v268
    %v270 = vlaneseq
    %v271 = vshrl.u32 %v270, 7
    %v272 = vsub.s32 %v269, %v271
    %v273 = vrot.slane %v263, %v272
    %v275 = vunpack.c.l.s4 1983009808
    %v276 = vunpack.c.0.s8 %v275
    %v277 = vlaneseq
    %v278 = vshrl.u32 %v277, 7
    %v279 = vsub.s32 %v276, %v278
    %v280 = vrot.slane %v264, %v279
    %v282 = vunpack.c.l.s4 1983009808
    %v283 = vunpack.c.0.s8 %v282
    %v284 = vlaneseq
    %v285 = vshrl.u32 %v284, 7
    %v286 = vsub.s32 %v283, %v285
    %v287 = vrot.slane %v265, %v286
    %v289 = vunpack.c.l.s4 1983009808
    %v290 = vunpack.c.0.s8 %v289
    %v291 = vlaneseq
    %v292 = vshrl.u32 %v291, 7
    %v293 = vsub.s32 %v290, %v292
    %v294 = vrot.slane %v266, %v293
    %v295 = vcombine.low %v273, %v287
    %v296 = vcombine.high %v273, %v287
    %v297 = vcombine.low %v280, %v294
    %v298 = vcombine.high %v280, %v294
    %307 = vmatprep.subr.mxu0 0.0
    %308 = vmatpush1.msra.mxu0 %v84
    %309 = vmatprep.subr.mxu0 0.0
    %310 = vmatpush1.msra.mxu0 %v85
    %311 = vmatprep.subr.mxu0 0.0
    %312 = vmatpush1.msra.mxu0 %v86
    %313 = vmatprep.subr.mxu0 0.0
    %314 = vmatpush1.msra.mxu0 %v87
    %315 = vmatprep.subr.mxu0 0.0
    %316 = vmatpush1.msra.mxu0 %v88
    %317 = vmatprep.subr.mxu0 0.0
    %318 = vmatpush1.msra.mxu0 %v89
    %319 = vmatprep.subr.mxu0 0.0
    %320 = vmatpush1.msra.mxu0 %v90
    %321 = vmatprep.subr.mxu0 0.0
    %322 = vmatpush1.msra.mxu0 %v91
    %323 = vmatprep.subr.mxu0 0.0
    %324 = vmatpush1.msra.mxu0 %v92
    %325 = vmatprep.subr.mxu0 0.0
    %326 = vmatpush1.msra.mxu0 %v93
    %327 = vmatprep.subr.mxu0 0.0
    %328 = vmatpush1.msra.mxu0 %v94
    %329 = vmatprep.subr.mxu0 0.0
    %330 = vmatpush1.msra.mxu0 %v95
    %331 = vmatprep.subr.mxu0 0.0
    %332 = vmatpush1.msra.mxu0 %v96
    %333 = vmatprep.subr.mxu0 0.0
    %334 = vmatpush1.msra.mxu0 %v97
    %335 = vmatprep.subr.mxu0 0.0
    %336 = vmatpush1.msra.mxu0 %v98
    %337 = vmatprep.subr.mxu0 0.0
    %338 = vmatpush1.msra.mxu0 %v99
    %339 = vmatprep.subr.mxu0 0.0
    %340 = vmatpush1.msra.mxu0 %v100
    %341 = vmatprep.subr.mxu0 0.0
    %342 = vmatpush1.msra.mxu0 %v101
    %343 = vmatprep.subr.mxu0 0.0
    %344 = vmatpush1.msra.mxu0 %v102
    %345 = vmatprep.subr.mxu0 0.0
    %346 = vmatpush1.msra.mxu0 %v103
    %347 = vmatprep.subr.mxu0 0.0
    %348 = vmatpush1.msra.mxu0 %v104
    %349 = vmatprep.subr.mxu0 0.0
    %350 = vmatpush1.msra.mxu0 %v105
    %351 = vmatprep.subr.mxu0 0.0
    %352 = vmatpush1.msra.mxu0 %v106
    %353 = vmatprep.subr.mxu0 0.0
    %354 = vmatpush1.msra.mxu0 %v107
    %355 = vmatprep.subr.mxu0 0.0
    %356 = vmatpush1.msra.mxu0 %v108
    %357 = vmatprep.subr.mxu0 0.0
    %358 = vmatpush1.msra.mxu0 %v109
    %359 = vmatprep.subr.mxu0 0.0
    %360 = vmatpush1.msra.mxu0 %v110
    %361 = vmatprep.subr.mxu0 0.0
    %362 = vmatpush1.msra.mxu0 %v111
    %363 = vmatprep.subr.mxu0 0.0
    %364 = vmatpush1.msra.mxu0 %v112
    %365 = vmatprep.subr.mxu0 0.0
    %366 = vmatpush1.msra.mxu0 %v113
    %367 = vmatprep.subr.mxu0 0.0
    %368 = vmatpush1.msra.mxu0 %v114
    %369 = vmatprep.subr.mxu0 0.0
    %370 = vmatpush1.msra.mxu0 %v115
    %371 = vmatprep.mubr.f32.mxu0 %v260
    %372 = vmatmul.mubr.f32.gmra.mrb[0].mxu0 %v259
    %v373 = vpop.f32.mrb[0].mxu0
    %v374 = vadd.f32 %v217, %v373
    %v375 = vpop.f32.mrb[0].mxu0
    %376 = vdwg.mxu0
    %377 = vmatprep.subr.mxu0 0.0
    %378 = vmatpush1.msra.mxu0 %v116
    %379 = vmatprep.subr.mxu0 0.0
    %380 = vmatpush1.msra.mxu0 %v117
    %381 = vmatprep.subr.mxu0 0.0
    %382 = vmatpush1.msra.mxu0 %v118
    %383 = vmatprep.subr.mxu0 0.0
    %384 = vmatpush1.msra.mxu0 %v119
    %385 = vmatprep.subr.mxu0 0.0
    %386 = vmatpush1.msra.mxu0 %v120
    %387 = vmatprep.subr.mxu0 0.0
    %388 = vmatpush1.msra.mxu0 %v121
    %389 = vmatprep.subr.mxu0 0.0
    %390 = vmatpush1.msra.mxu0 %v122
    %391 = vmatprep.subr.mxu0 0.0
    %392 = vmatpush1.msra.mxu0 %v123
    %393 = vmatprep.subr.mxu0 0.0
    %394 = vmatpush1.msra.mxu0 %v124
    %395 = vmatprep.subr.mxu0 0.0
    %396 = vmatpush1.msra.mxu0 %v125
    %397 = vmatprep.subr.mxu0 0.0
    %398 = vmatpush1.msra.mxu0 %v126
    %399 = vmatprep.subr.mxu0 0.0
    %400 = vmatpush1.msra.mxu0 %v127
    %401 = vmatprep.subr.mxu0 0.0
    %402 = vmatpush1.msra.mxu0 %v128
    %403 = vmatprep.subr.mxu0 0.0
    %404 = vmatpush1.msra.mxu0 %v129
    %405 = vmatprep.subr.mxu0 0.0
    %406 = vmatpush1.msra.mxu0 %v130
    %407 = vmatprep.subr.mxu0 0.0
    %408 = vmatpush1.msra.mxu0 %v131
    %409 = vmatprep.subr.mxu0 0.0
    %410 = vmatpush1.msra.mxu0 %v132
    %411 = vmatprep.subr.mxu0 0.0
    %412 = vmatpush1.msra.mxu0 %v133
    %413 = vmatprep.subr.mxu0 0.0
    %414 = vmatpush1.msra.mxu0 %v134
    %415 = vmatprep.subr.mxu0 0.0
    %416 = vmatpush1.msra.mxu0 %v135
    %417 = vmatprep.subr.mxu0 0.0
    %418 = vmatpush1.msra.mxu0 %v136
    %419 = vmatprep.subr.mxu0 0.0
    %420 = vmatpush1.msra.mxu0 %v137
    %421 = vmatprep.subr.mxu0 0.0
    %422 = vmatpush1.msra.mxu0 %v138
    %423 = vmatprep.subr.mxu0 0.0
    %424 = vmatpush1.msra.mxu0 %v139
    %425 = vmatprep.subr.mxu0 0.0
    %426 = vmatpush1.msra.mxu0 %v140
    %427 = vmatprep.subr.mxu0 0.0
    %428 = vmatpush1.msra.mxu0 %v141
    %429 = vmatprep.subr.mxu0 0.0
    %430 = vmatpush1.msra.mxu0 %v142
    %431 = vmatprep.subr.mxu0 0.0
    %432 = vmatpush1.msra.mxu0 %v143
    %433 = vmatprep.subr.mxu0 0.0
    %434 = vmatpush1.msra.mxu0 %v144
    %435 = vmatprep.subr.mxu0 0.0
    %436 = vmatpush1.msra.mxu0 %v145
    %437 = vmatprep.subr.mxu0 0.0
    %438 = vmatpush1.msra.mxu0 %v146
    %439 = vmatprep.subr.mxu0 0.0
    %440 = vmatpush1.msra.mxu0 %v147
    %441 = vmatprep.mubr.f32.mxu0 %v262
    %442 = vmatmul.mubr.f32.gmra.mrb[0].mxu0 %v261
    %v443 = vpop.f32.mrb[0].mxu0
    %v444 = vadd.f32 %v374, %v443
    %v445 = vpop.f32.mrb[0].mxu0
    %446 = vdwg.mxu0
    %447 = vmatprep.subr.mxu0 0.0
    %448 = vmatpush1.msra.mxu0 %v148
    %449 = vmatprep.subr.mxu0 0.0
    %450 = vmatpush1.msra.mxu0 %v149
    %451 = vmatprep.subr.mxu0 0.0
    %452 = vmatpush1.msra.mxu0 %v150
    %453 = vmatprep.subr.mxu0 0.0
    %454 = vmatpush1.msra.mxu0 %v151
    %455 = vmatprep.subr.mxu0 0.0
    %456 = vmatpush1.msra.mxu0 %v152
    %457 = vmatprep.subr.mxu0 0.0
    %458 = vmatpush1.msra.mxu0 %v153
    %459 = vmatprep.subr.mxu0 0.0
    %460 = vmatpush1.msra.mxu0 %v154
    %461 = vmatprep.subr.mxu0 0.0
    %462 = vmatpush1.msra.mxu0 %v155
    %463 = vmatprep.subr.mxu0 0.0
    %464 = vmatpush1.msra.mxu0 %v156
    %465 = vmatprep.subr.mxu0 0.0
    %466 = vmatpush1.msra.mxu0 %v157
    %467 = vmatprep.subr.mxu0 0.0
    %468 = vmatpush1.msra.mxu0 %v158
    %469 = vmatprep.subr.mxu0 0.0
    %470 = vmatpush1.msra.mxu0 %v159
    %471 = vmatprep.subr.mxu0 0.0
    %472 = vmatpush1.msra.mxu0 %v160
    %473 = vmatprep.subr.mxu0 0.0
    %474 = vmatpush1.msra.mxu0 %v161
    %475 = vmatprep.subr.mxu0 0.0
    %476 = vmatpush1.msra.mxu0 %v162
    %477 = vmatprep.subr.mxu0 0.0
    %478 = vmatpush1.msra.mxu0 %v163
    %479 = vmatprep.subr.mxu0 0.0
    %480 = vmatpush1.msra.mxu0 %v164
    %481 = vmatprep.subr.mxu0 0.0
    %482 = vmatpush1.msra.mxu0 %v165
    %483 = vmatprep.subr.mxu0 0.0
    %484 = vmatpush1.msra.mxu0 %v166
    %485 = vmatprep.subr.mxu0 0.0
    %486 = vmatpush1.msra.mxu0 %v167
    %487 = vmatprep.subr.mxu0 0.0
    %488 = vmatpush1.msra.mxu0 %v168
    %489 = vmatprep.subr.mxu0 0.0
    %490 = vmatpush1.msra.mxu0 %v169
    %491 = vmatprep.subr.mxu0 0.0
    %492 = vmatpush1.msra.mxu0 %v170
    %493 = vmatprep.subr.mxu0 0.0
    %494 = vmatpush1.msra.mxu0 %v171
    %495 = vmatprep.subr.mxu0 0.0
    %496 = vmatpush1.msra.mxu0 %v172
    %497 = vmatprep.subr.mxu0 0.0
    %498 = vmatpush1.msra.mxu0 %v173
    %499 = vmatprep.subr.mxu0 0.0
    %500 = vmatpush1.msra.mxu0 %v174
    %501 = vmatprep.subr.mxu0 0.0
    %502 = vmatpush1.msra.mxu0 %v175
    %503 = vmatprep.subr.mxu0 0.0
    %504 = vmatpush1.msra.mxu0 %v176
    %505 = vmatprep.subr.mxu0 0.0
    %506 = vmatpush1.msra.mxu0 %v177
    %507 = vmatprep.subr.mxu0 0.0
    %508 = vmatpush1.msra.mxu0 %v178
    %509 = vmatprep.subr.mxu0 0.0
    %510 = vmatpush1.msra.mxu0 %v179
    %511 = vmatprep.mubr.f32.mxu0 %v296
    %512 = vmatmul.mubr.f32.gmra.mrb[0].mxu0 %v295
    %v513 = vpop.f32.mrb[0].mxu0
    %v514 = vadd.f32 %v444, %v513
    %v515 = vpop.f32.mrb[0].mxu0
    %516 = vdwg.mxu0
    %517 = vmatprep.subr.mxu0 0.0
    %518 = vmatpush1.msra.mxu0 %v180
    %519 = vmatprep.subr.mxu0 0.0
    %520 = vmatpush1.msra.mxu0 %v181
    %521 = vmatprep.subr.mxu0 0.0
    %522 = vmatpush1.msra.mxu0 %v182
    %523 = vmatprep.subr.mxu0 0.0
    %524 = vmatpush1.msra.mxu0 %v183
    %525 = vmatprep.subr.mxu0 0.0
    %526 = vmatpush1.msra.mxu0 %v184
    %527 = vmatprep.subr.mxu0 0.0
    %528 = vmatpush1.msra.mxu0 %v185
    %529 = vmatprep.subr.mxu0 0.0
    %530 = vmatpush1.msra.mxu0 %v186
    %531 = vmatprep.subr.mxu0 0.0
    %532 = vmatpush1.msra.mxu0 %v187
    %533 = vmatprep.subr.mxu0 0.0
    %534 = vmatpush1.msra.mxu0 %v188
    %535 = vmatprep.subr.mxu0 0.0
    %536 = vmatpush1.msra.mxu0 %v189
    %537 = vmatprep.subr.mxu0 0.0
    %538 = vmatpush1.msra.mxu0 %v190
    %539 = vmatprep.subr.mxu0 0.0
    %540 = vmatpush1.msra.mxu0 %v191
    %541 = vmatprep.subr.mxu0 0.0
    %542 = vmatpush1.msra.mxu0 %v192
    %543 = vmatprep.subr.mxu0 0.0
    %544 = vmatpush1.msra.mxu0 %v193
    %545 = vmatprep.subr.mxu0 0.0
    %546 = vmatpush1.msra.mxu0 %v194
    %547 = vmatprep.subr.mxu0 0.0
    %548 = vmatpush1.msra.mxu0 %v195
    %549 = vmatprep.subr.mxu0 0.0
    %550 = vmatpush1.msra.mxu0 %v196
    %551 = vmatprep.subr.mxu0 0.0
    %552 = vmatpush1.msra.mxu0 %v197
    %553 = vmatprep.subr.mxu0 0.0
    %554 = vmatpush1.msra.mxu0 %v198
    %555 = vmatprep.subr.mxu0 0.0
    %556 = vmatpush1.msra.mxu0 %v199
    %557 = vmatprep.subr.mxu0 0.0
    %558 = vmatpush1.msra.mxu0 %v200
    %559 = vmatprep.subr.mxu0 0.0
    %560 = vmatpush1.msra.mxu0 %v201
    %561 = vmatprep.subr.mxu0 0.0
    %562 = vmatpush1.msra.mxu0 %v202
    %563 = vmatprep.subr.mxu0 0.0
    %564 = vmatpush1.msra.mxu0 %v203
    %565 = vmatprep.subr.mxu0 0.0
    %566 = vmatpush1.msra.mxu0 %v204
    %567 = vmatprep.subr.mxu0 0.0
    %568 = vmatpush1.msra.mxu0 %v205
    %569 = vmatprep.subr.mxu0 0.0
    %570 = vmatpush1.msra.mxu0 %v206
    %571 = vmatprep.subr.mxu0 0.0
    %572 = vmatpush1.msra.mxu0 %v207
    %573 = vmatprep.subr.mxu0 0.0
    %574 = vmatpush1.msra.mxu0 %v208
    %575 = vmatprep.subr.mxu0 0.0
    %576 = vmatpush1.msra.mxu0 %v209
    %577 = vmatprep.subr.mxu0 0.0
    %578 = vmatpush1.msra.mxu0 %v210
    %579 = vmatprep.subr.mxu0 0.0
    %580 = vmatpush1.msra.mxu0 %v211
    %581 = vmatprep.mubr.f32.mxu0 %v298
    %582 = vmatmul.mubr.f32.gmra.mrb[0].mxu0 %v297
    %v583 = vpop.f32.mrb[0].mxu0
    %v584 = vadd.f32 %v514, %v583
    %v585 = vpop.f32.mrb[0].mxu0
    %586 = vdwg.mxu0
    %v587 = vmax.f32 %v584, 0.0
    %v588 = vld [vmem:[#allocation7] sm:$0xff]
    %v589 = vld [vmem:[#allocation7 + $0x8] sm:$0xff]
    %v590 = vld [vmem:[#allocation7 + $0x10] sm:$0xff]
    %v591 = vld [vmem:[#allocation7 + $0x18] sm:$0xff]
    %v592 = vld [vmem:[#allocation7 + $0x20] sm:$0xff]
    %v593 = vld [vmem:[#allocation7 + $0x28] sm:$0xff]
    %v594 = vld [vmem:[#allocation7 + $0x30] sm:$0xff]
    %v595 = vld [vmem:[#allocation7 + $0x38] sm:$0xff]
    %v596 = vld [vmem:[#allocation7 + $0x40] sm:$0xff]
    %v597 = vld [vmem:[#allocation7 + $0x48] sm:$0xff]
    %v598 = vld [vmem:[#allocation7 + $0x50] sm:$0xff]
    %v599 = vld [vmem:[#allocation7 + $0x58] sm:$0xff]
    %v600 = vld [vmem:[#allocation7 + $0x60] sm:$0xff]
    %v601 = vld [vmem:[#allocation7 + $0x68] sm:$0xff]
    %v602 = vld [vmem:[#allocation7 + $0x70] sm:$0xff]
    %v603 = vld [vmem:[#allocation7 + $0x78] sm:$0xff]
    %v604 = vld [vmem:[%s4 + $0x1] sm:$0x1]
    %v606 = vlaneseq
    %v607 = vshrl.u32 %v606, 7
    %v608 = vsub.s32 0, %v607
    %v609 = vrot.slane %v604, %v608
    %611 = vmatprep.subr.mxu0 0.0
    %612 = vmatpush1.msra.mxu0 %v588
    %613 = vmatprep.subr.mxu0 0.0
    %614 = vmatpush1.msra.mxu0 %v589
    %615 = vmatprep.subr.mxu0 0.0
    %616 = vmatpush1.msra.mxu0 %v590
    %617 = vmatprep.subr.mxu0 0.0
    %618 = vmatpush1.msra.mxu0 %v591
    %619 = vmatprep.subr.mxu0 0.0
    %620 = vmatpush1.msra.mxu0 %v592
    %621 = vmatprep.subr.mxu0 0.0
    %622 = vmatpush1.msra.mxu0 %v593
    %623 = vmatprep.subr.mxu0 0.0
    %624 = vmatpush1.msra.mxu0 %v594
    %625 = vmatprep.subr.mxu0 0.0
    %626 = vmatpush1.msra.mxu0 %v595
    %627 = vmatprep.subr.mxu0 0.0
    %628 = vmatpush1.msra.mxu0 %v596
    %629 = vmatprep.subr.mxu0 0.0
    %630 = vmatpush1.msra.mxu0 %v597
    %631 = vmatprep.subr.mxu0 0.0
    %632 = vmatpush1.msra.mxu0 %v598
    %633 = vmatprep.subr.mxu0 0.0
    %634 = vmatpush1.msra.mxu0 %v599
    %635 = vmatprep.subr.mxu0 0.0
    %636 = vmatpush1.msra.mxu0 %v600
    %637 = vmatprep.subr.mxu0 0.0
    %638 = vmatpush1.msra.mxu0 %v601
    %639 = vmatprep.subr.mxu0 0.0
    %640 = vmatpush1.msra.mxu0 %v602
    %641 = vmatprep.subr.mxu0 0.0
    %642 = vmatpush1.msra.mxu0 %v603
    %643 = vmatprep.subr.mxu0 0.0
    %644 = vmatpush1.msra.mxu0 0.0
    %645 = vmatprep.subr.mxu0 0.0
    %646 = vmatpush1.msra.mxu0 0.0
    %647 = vmatprep.subr.mxu0 0.0
    %648 = vmatpush1.msra.mxu0 0.0
    %649 = vmatprep.subr.mxu0 0.0
    %650 = vmatpush1.msra.mxu0 0.0
    %651 = vmatprep.subr.mxu0 0.0
    %652 = vmatpush1.msra.mxu0 0.0
    %653 = vmatprep.subr.mxu0 0.0
    %654 = vmatpush1.msra.mxu0 0.0
    %655 = vmatprep.subr.mxu0 0.0
    %656 = vmatpush1.msra.mxu0 0.0
    %657 = vmatprep.subr.mxu0 0.0
    %658 = vmatpush1.msra.mxu0 0.0
    %659 = vmatprep.subr.mxu0 0.0
    %660 = vmatpush1.msra.mxu0 0.0
    %661 = vmatprep.subr.mxu0 0.0
    %662 = vmatpush1.msra.mxu0 0.0
    %663 = vmatprep.subr.mxu0 0.0
    %664 = vmatpush1.msra.mxu0 0.0
    %665 = vmatprep.subr.mxu0 0.0
    %666 = vmatpush1.msra.mxu0 0.0
    %667 = vmatprep.subr.mxu0 0.0
    %668 = vmatpush1.msra.mxu0 0.0
    %669 = vmatprep.subr.mxu0 0.0
    %670 = vmatpush1.msra.mxu0 0.0
    %671 = vmatprep.subr.mxu0 0.0
    %672 = vmatpush1.msra.mxu0 0.0
    %673 = vmatprep.subr.mxu0 0.0
    %674 = vmatpush1.msra.mxu0 0.0
    %675 = vmatprep.mubr.f32.mxu0 0.0
    %676 = vmatmul.mubr.f32.gmra.mrb[0].mxu0 %v587
    %v677 = vpop.f32.mrb[0].mxu0
    %v678 = vadd.f32 %v609, %v677
    %v679 = vpop.f32.mrb[0].mxu0
    %680 = vdwg.mxu0
    %v681 = vmax.f32 %v678, 0.0
    %v682 = vld [vmem:[#allocation8] sm:$0xff]
    %v683 = vld [vmem:[#allocation8 + $0x8] sm:$0xff]
    %v684 = vld [vmem:[#allocation8 + $0x10] sm:$0xff]
    %v685 = vld [vmem:[#allocation8 + $0x18] sm:$0xff]
    %v686 = vld [vmem:[#allocation8 + $0x20] sm:$0xff]
    %v687 = vld [vmem:[#allocation8 + $0x28] sm:$0xff]
    %v688 = vld [vmem:[#allocation8 + $0x30] sm:$0xff]
    %v689 = vld [vmem:[#allocation8 + $0x38] sm:$0xff]
    %v690 = vld [vmem:[#allocation8 + $0x40] sm:$0xff]
    %v691 = vld [vmem:[#allocation8 + $0x48] sm:$0xff]
    %v692 = vld [vmem:[#allocation8 + $0x50] sm:$0xff]
    %v693 = vld [vmem:[#allocation8 + $0x58] sm:$0xff]
    %v694 = vld [vmem:[#allocation8 + $0x60] sm:$0xff]
    %v695 = vld [vmem:[#allocation8 + $0x68] sm:$0xff]
    %v696 = vld [vmem:[#allocation8 + $0x70] sm:$0xff]
    %v697 = vld [vmem:[#allocation8 + $0x78] sm:$0xff]
    %v698 = vld [vmem:[%s4 + $0x2] sm:$0x1]
    %v700 = vlaneseq
    %v701 = vshrl.u32 %v700, 7
    %v702 = vsub.s32 0, %v701
    %v703 = vrot.slane %v698, %v702
    %705 = vmatprep.subr.mxu0 0.0
    %706 = vmatpush1.msra.mxu0 %v682
    %707 = vmatprep.subr.mxu0 0.0
    %708 = vmatpush1.msra.mxu0 %v683
    %709 = vmatprep.subr.mxu0 0.0
    %710 = vmatpush1.msra.mxu0 %v684
    %711 = vmatprep.subr.mxu0 0.0
    %712 = vmatpush1.msra.mxu0 %v685
    %713 = vmatprep.subr.mxu0 0.0
    %714 = vmatpush1.msra.mxu0 %v686
    %715 = vmatprep.subr.mxu0 0.0
    %716 = vmatpush1.msra.mxu0 %v687
    %717 = vmatprep.subr.mxu0 0.0
    %718 = vmatpush1.msra.mxu0 %v688
    %719 = vmatprep.subr.mxu0 0.0
    %720 = vmatpush1.msra.mxu0 %v689
    %721 = vmatprep.subr.mxu0 0.0
    %722 = vmatpush1.msra.mxu0 %v690
    %723 = vmatprep.subr.mxu0 0.0
    %724 = vmatpush1.msra.mxu0 %v691
    %725 = vmatprep.subr.mxu0 0.0
    %726 = vmatpush1.msra.mxu0 %v692
    %727 = vmatprep.subr.mxu0 0.0
    %728 = vmatpush1.msra.mxu0 %v693
    %729 = vmatprep.subr.mxu0 0.0
    %730 = vmatpush1.msra.mxu0 %v694
    %731 = vmatprep.subr.mxu0 0.0
    %732 = vmatpush1.msra.mxu0 %v695
    %733 = vmatprep.subr.mxu0 0.0
    %734 = vmatpush1.msra.mxu0 %v696
    %735 = vmatprep.subr.mxu0 0.0
    %736 = vmatpush1.msra.mxu0 %v697
    %737 = vmatprep.subr.mxu0 0.0
    %738 = vmatpush1.msra.mxu0 0.0
    %739 = vmatprep.subr.mxu0 0.0
    %740 = vmatpush1.msra.mxu0 0.0
    %741 = vmatprep.subr.mxu0 0.0
    %742 = vmatpush1.msra.mxu0 0.0
    %743 = vmatprep.subr.mxu0 0.0
    %744 = vmatpush1.msra.mxu0 0.0
    %745 = vmatprep.subr.mxu0 0.0
    %746 = vmatpush1.msra.mxu0 0.0
    %747 = vmatprep.subr.mxu0 0.0
    %748 = vmatpush1.msra.mxu0 0.0
    %749 = vmatprep.subr.mxu0 0.0
    %750 = vmatpush1.msra.mxu0 0.0
    %751 = vmatprep.subr.mxu0 0.0
    %752 = vmatpush1.msra.mxu0 0.0
    %753 = vmatprep.subr.mxu0 0.0
    %754 = vmatpush1.msra.mxu0 0.0
    %755 = vmatprep.subr.mxu0 0.0
    %756 = vmatpush1.msra.mxu0 0.0
    %757 = vmatprep.subr.mxu0 0.0
    %758 = vmatpush1.msra.mxu0 0.0
    %759 = vmatprep.subr.mxu0 0.0
    %760 = vmatpush1.msra.mxu0 0.0
    %761 = vmatprep.subr.mxu0 0.0
    %762 = vmatpush1.msra.mxu0 0.0
    %763 = vmatprep.subr.mxu0 0.0
    %764 = vmatpush1.msra.mxu0 0.0
    %765 = vmatprep.subr.mxu0 0.0
    %766 = vmatpush1.msra.mxu0 0.0
    %767 = vmatprep.subr.mxu0 0.0
    %768 = vmatpush1.msra.mxu0 0.0
    %769 = vmatprep.mubr.f32.mxu0 0.0
    %770 = vmatmul.mubr.f32.gmra.mrb[0].mxu0 %v681
    %v771 = vpop.f32.mrb[0].mxu0
    %v772 = vadd.f32 %v703, %v771
    %v773 = vpop.f32.mrb[0].mxu0
    %774 = vdwg.mxu0
    %775 = vmax.xlane.f32.xlu0 %v772
    %v776 = vpop.xlane.xlu0 %775
    %v777 = vsub.f32 %v772, %v776
    %v778 = vmul.f32 %v777, 1.442695
    %v779 = vpow.pop %v778
    %780 = vadd.xlane.f32.xlu0 %v779
    %v781 = vpop.xlane.xlu0 %780
    %v782 = vrcp.pop %v781
    %v783 = vmul.f32 %v781, %v782
    %v784 = vsub.f32 2.0, %v783
    %v785 = vmul.f32 %v782, %v784
    %v786 = vmul.f32 %v779, %v785
    %787 = vst [vmem:[#allocation10] sm:$0xff] %v786
    // Predicated region
    $region38: #{tpu_custom_call.1} parent=1 // pred_check
      _
    $region39: #{tpu_custom_call.1} parent=1 // pred_check_branch
      %789 = sbr.rel (0) target = $region41
    $region40: #{tpu_custom_call.1} parent=1 // pred_region
      %s791 = ssub.s32 128, 128
      %792 = vsyncadd [#allocation4], %s791
      %s794 = sshll.u32 [#allocation10], 4
      %s795 = int_to_ptr.vmem [resolvable:$true] %s794
      %797 = dma.vmem_to_hbm [thread:$0]  %s795, 128, %s5, [#allocation4]
    $region41: #{tpu_custom_call.1} parent=1 // pred_fallthru
      _
    // Predicated region
    $region42: #{tpu_custom_call.1} parent=1 // pred_check
      _
    $region43: #{tpu_custom_call.1} parent=1 // pred_check_branch
      %799 = sbr.rel (0) target = $region45
    $region44: #{tpu_custom_call.1} parent=1 // pred_region
      %800 = dma.done [#allocation4], 128
    $region45: #{tpu_custom_call.1} parent=1 // pred_fallthru
      _
    %801 = vsyncpa [#allocation3], 1
    %802 = vsyncpa [#allocation6], 1
    %803 = vsyncpa [#allocation9], 1
    %804 = vsyncpa [#allocation4], 1

// kernel: tpu_custom_call.1
$region0: #{tpu_custom_call.1}
  #allocation0 [shape = 'u32[]', space=smem, size = 0x4, offset = 0x4, fixed_abs, tag = 'smem constant byte address 0x4 - core index']
  #allocation1 [shape = 'u32[144,128]{1,0:T(1,128)}', space=vmem, size = 0x12000, scoped, tag = 'internal scratch']
  %s0 = inlined_call_operand.hbm [shape: f32[2,1024], index: 0, kind: input, shape index: {}]
  %s1 = inlined_call_operand.hbm [shape: f32[1024,128], index: 1, kind: input, shape index: {}]
  %s2 = inlined_call_operand.hbm [shape: f32[128,128], index: 2, kind: input, shape index: {}]
  %s3 = inlined_call_operand.hbm [shape: f32[128,128], index: 3, kind: input, shape index: {}]
  %s4 = inlined_call_operand.vmem [shape: f32[1,384], index: 4, kind: input, shape index: {}]
  %s5 = inlined_call_operand.hbm [shape: f32[8,128], index: 5, kind: output, shape index: {}]
  %s6 = sld [smem:[#allocation0]]
  $region46: #{tpu_custom_call.1} parent=0
    _
  %s8 = ssub.s32 1, %s6
  %s9 = scalar_select 0, %s8, %s6
  $region1: #{tpu_custom_call.1} parent=0
    #allocation2 [shape = 'u8[32768]{0}', space=vmem, size = 0x8000, scoped, tag = 'input window, operand 0, single buffered']
    #allocation3 [shape = 's32[1]{0}', space=sflag, size = 0x4, scoped, tag = 'scoped memory for tpu_custom_call.1']
    #allocation4 [shape = 's32[1]{0}', space=sflag, size = 0x4, scoped, tag = 'scoped memory for tpu_custom_call.1']
    #allocation5 [shape = 'u8[524288]{0}', space=vmem, size = 0x80000, scoped, tag = 'input window, operand 1, single buffered']
    #allocation6 [shape = 's32[1]{0}', space=sflag, size = 0x4, scoped, tag = 'scoped memory for tpu_custom_call.1']
    #allocation7 [shape = 'u8[65536]{0}', space=vmem, size = 0x10000, scoped, tag = 'input window, operand 2, single buffered']
    #allocation8 [shape = 'u8[65536]{0}', space=vmem, size = 0x10000, scoped, tag = 'input window, operand 3, single buffered']
    #allocation9 [shape = 's32[1]{0}', space=sflag, size = 0x4, scoped, tag = 'scoped memory for tpu_custom_call.1']
    #allocation10 [shape = 'u8[4096]{0}', space=vmem, size = 0x1000, scoped, tag = 'output window, operand 0, single buffered']
    %10 = vsyncpa [#allocation3], 0
    %11 = vsyncpa [#allocation6], 0
    %12 = vsyncpa [#allocation9], 0
    %13 = vsyncpa [#allocation4], 0
    // Predicated region
    $region2: #{tpu_custom_call.1} parent=1 // pred_check
      _
    $region3: #{tpu_custom_call.1} parent=1 // pred_check_branch
      %15 = sbr.rel (0) target = $region5
    $region4: #{tpu_custom_call.1} parent=1 // pred_region
      %s17 = ssub.s32 1024, 256
      %18 = vsyncadd [#allocation3], %s17
      %s19 = sshll.u32 [#allocation2], 4
      %s20 = int_to_ptr.vmem [resolvable:$true] %s19
      %25 = dma.hbm_to_vmem [thread:$0]  %s0, 256, %s20, [#allocation3], 256, 256, 16
    $region5: #{tpu_custom_call.1} parent=1 // pred_fallthru
      _
    // Predicated region
    $region6: #{tpu_custom_call.1} parent=1 // pred_check
      _
    $region7: #{tpu_custom_call.1} parent=1 // pred_check_branch
      %27 = sbr.rel (0) target = $region9
    $region8: #{tpu_custom_call.1} parent=1 // pred_region
      %s29 = ssub.s32 16384, 16384
      %30 = vsyncadd [#allocation6], %s29
      %s31 = sshll.u32 [#allocation5], 4
      %s32 = int_to_ptr.vmem [resolvable:$true] %s31
      %37 = dma.hbm_to_vmem [thread:$0]  %s1, 16384, %s32, [#allocation6], 128, 128, 8
    $region9: #{tpu_custom_call.1} parent=1 // pred_fallthru
      _
    // Predicated region
    $region10: #{tpu_custom_call.1} parent=1 // pred_check
      _
    $region11: #{tpu_custom_call.1} parent=1 // pred_check_branch
      %39 = sbr.rel (0) target = $region13
    $region12: #{tpu_custom_call.1} parent=1 // pred_region
      %s41 = ssub.s32 2048, 2048
      %42 = vsyncadd [#allocation6], %s41
      %s43 = sshll.u32 [#allocation7], 4
      %s44 = int_to_ptr.vmem [resolvable:$true] %s43
      %49 = dma.hbm_to_vmem [thread:$0]  %s2, 2048, %s44, [#allocation6], 128, 128, 8
    $region13: #{tpu_custom_call.1} parent=1 // pred_fallthru
      _
    // Predicated region
    $region14: #{tpu_custom_call.1} parent=1 // pred_check
      _
    $region15: #{tpu_custom_call.1} parent=1 // pred_check_branch
      %51 = sbr.rel (0) target = $region17
    $region16: #{tpu_custom_call.1} parent=1 // pred_region
      %s53 = ssub.s32 2048, 2048
      %54 = vsyncadd [#allocation9], %s53
      %s55 = sshll.u32 [#allocation8], 4
      %s56 = int_to_ptr.vmem [resolvable:$true] %s55
      %61 = dma.hbm_to_vmem [thread:$0]  %s3, 2048, %s56, [#allocation9], 128, 128, 8
    $region17: #{tpu_custom_call.1} parent=1 // pred_fallthru
      _
    // Predicated region
    $region18: #{tpu_custom_call.1} parent=1 // pred_check
      _
    $region19: #{tpu_custom_call.1} parent=1 // pred_check_branch
      %63 = sbr.rel (0) target = $region21
    $region20: #{tpu_custom_call.1} parent=1 // pred_region
      _
    $region21: #{tpu_custom_call.1} parent=1 // pred_fallthru
      _
    // Predicated region
    $region22: #{tpu_custom_call.1} parent=1 // pred_check
      _
    $region23: #{tpu_custom_call.1} parent=1 // pred_check_branch
      %65 = sbr.rel (0) target = $region25
    $region24: #{tpu_custom_call.1} parent=1 // pred_region
      %66 = dma.done [#allocation3], 1024
    $region25: #{tpu_custom_call.1} parent=1 // pred_fallthru
      _
    // Predicated region
    $region26: #{tpu_custom_call.1} parent=1 // pred_check
      _
    $region27: #{tpu_custom_call.1} parent=1 // pred_check_branch
      %68 = sbr.rel (0) target = $region29
    $region28: #{tpu_custom_call.1} parent=1 // pred_region
      %69 = dma.done [#allocation6], 16384
    $region29: #{tpu_custom_call.1} parent=1 // pred_fallthru
      _
    // Predicated region
    $region30: #{tpu_custom_call.1} parent=1 // pred_check
      _
    $region31: #{tpu_custom_call.1} parent=1 // pred_check_branch
      %71 = sbr.rel (0) target = $region33
    $region32: #{tpu_custom_call.1} parent=1 // pred_region
      %72 = dma.done [#allocation6], 2048
    $region33: #{tpu_custom_call.1} parent=1 // pred_fallthru
      _
    // Predicated region
    $region34: #{tpu_custom_call.1} parent=1 // pred_check
      _
    $region35: #{tpu_custom_call.1} parent=1 // pred_check_branch
      %74 = sbr.rel (0) target = $region37
    $region36: #{tpu_custom_call.1} parent=1 // pred_region
      %75 = dma.done [#allocation9], 2048
    $region37: #{tpu_custom_call.1} parent=1 // pred_fallthru
      _
    %v76 = vld [vmem:[#allocation2] sm:$0xff]
    %v77 = vld [vmem:[#allocation2 + $0x8] sm:$0xff]
    %v78 = vld [vmem:[#allocation2 + $0x10] sm:$0xff]
    %v79 = vld [vmem:[#allocation2 + $0x18] sm:$0xff]
    %v80 = vld [vmem:[#allocation2 + $0x20] sm:$0xff]
    %v81 = vld [vmem:[#allocation2 + $0x28] sm:$0xff]
    %v82 = vld [vmem:[#allocation2 + $0x30] sm:$0xff]
    %v83 = vld [vmem:[#allocation2 + $0x38] sm:$0xff]
    %v84 = vld [vmem:[#allocation5] sm:$0xff]
    %v85 = vld [vmem:[#allocation5 + $0x8] sm:$0xff]
    %v86 = vld [vmem:[#allocation5 + $0x10] sm:$0xff]
    %v87 = vld [vmem:[#allocation5 + $0x18] sm:$0xff]
    %v88 = vld [vmem:[#allocation5 + $0x20] sm:$0xff]
    %v89 = vld [vmem:[#allocation5 + $0x28] sm:$0xff]
    %v90 = vld [vmem:[#allocation5 + $0x30] sm:$0xff]
    %v91 = vld [vmem:[#allocation5 + $0x38] sm:$0xff]
    %v92 = vld [vmem:[#allocation5 + $0x40] sm:$0xff]
    %v93 = vld [vmem:[#allocation5 + $0x48] sm:$0xff]
    %v94 = vld [vmem:[#allocation5 + $0x50] sm:$0xff]
    %v95 = vld [vmem:[#allocation5 + $0x58] sm:$0xff]
    %v96 = vld [vmem:[#allocation5 + $0x60] sm:$0xff]
    %v97 = vld [vmem:[#allocation5 + $0x68] sm:$0xff]
    %v98 = vld [vmem:[#allocation5 + $0x70] sm:$0xff]
    %v99 = vld [vmem:[#allocation5 + $0x78] sm:$0xff]
    %v100 = vld [vmem:[#allocation5 + $0x80] sm:$0xff]
    %v101 = vld [vmem:[#allocation5 + $0x88] sm:$0xff]
    %v102 = vld [vmem:[#allocation5 + $0x90] sm:$0xff]
    %v103 = vld [vmem:[#allocation5 + $0x98] sm:$0xff]
    %v104 = vld [vmem:[#allocation5 + $0xa0] sm:$0xff]
    %v105 = vld [vmem:[#allocation5 + $0xa8] sm:$0xff]
    %v106 = vld [vmem:[#allocation5 + $0xb0] sm:$0xff]
    %v107 = vld [vmem:[#allocation5 + $0xb8] sm:$0xff]
    %v108 = vld [vmem:[#allocation5 + $0xc0] sm:$0xff]
    %v109 = vld [vmem:[#allocation5 + $0xc8] sm:$0xff]
    %v110 = vld [vmem:[#allocation5 + $0xd0] sm:$0xff]
    %v111 = vld [vmem:[#allocation5 + $0xd8] sm:$0xff]
    %v112 = vld [vmem:[#allocation5 + $0xe0] sm:$0xff]
    %v113 = vld [vmem:[#allocation5 + $0xe8] sm:$0xff]
    %v114 = vld [vmem:[#allocation5 + $0xf0] sm:$0xff]
    %v115 = vld [vmem:[#allocation5 + $0xf8] sm:$0xff]
    %v116 = vld [vmem:[#allocation5 + $0x100] sm:$0xff]
    %v117 = vld [vmem:[#allocation5 + $0x108] sm:$0xff]
    %v118 = vld [vmem:[#allocation5 + $0x110] sm:$0xff]
    %v119 = vld [vmem:[#allocation5 + $0x118] sm:$0xff]
    %v120 = vld [vmem:[#allocation5 + $0x120] sm:$0xff]
    %v121 = vld [vmem:[#allocation5 + $0x128] sm:$0xff]
    %v122 = vld [vmem:[#allocation5 + $0x130] sm:$0xff]
    %v123 = vld [vmem:[#allocation5 + $0x138] sm:$0xff]
    %v124 = vld [vmem:[#allocation5 + $0x140] sm:$0xff]
    %v125 = vld [vmem:[#allocation5 + $0x148] sm:$0xff]
    %v126 = vld [vmem:[#allocation5 + $0x150] sm:$0xff]
    %v127 = vld [vmem:[#allocation5 + $0x158] sm:$0xff]
    %v128 = vld [vmem:[#allocation5 + $0x160] sm:$0xff]
    %v129 = vld [vmem:[#allocation5 + $0x168] sm:$0xff]
    %v130 = vld [vmem:[#allocation5 + $0x170] sm:$0xff]
    %v131 = vld [vmem:[#allocation5 + $0x178] sm:$0xff]
    %v132 = vld [vmem:[#allocation5 + $0x180] sm:$0xff]
    %v133 = vld [vmem:[#allocation5 + $0x188] sm:$0xff]
    %v134 = vld [vmem:[#allocation5 + $0x190] sm:$0xff]
    %v135 = vld [vmem:[#allocation5 + $0x198] sm:$0xff]
    %v136 = vld [vmem:[#allocation5 + $0x1a0] sm:$0xff]
    %v137 = vld [vmem:[#allocation5 + $0x1a8] sm:$0xff]
    %v138 = vld [vmem:[#allocation5 + $0x1b0] sm:$0xff]
    %v139 = vld [vmem:[#allocation5 + $0x1b8] sm:$0xff]
    %v140 = vld [vmem:[#allocation5 + $0x1c0] sm:$0xff]
    %v141 = vld [vmem:[#allocation5 + $0x1c8] sm:$0xff]
    %v142 = vld [vmem:[#allocation5 + $0x1d0] sm:$0xff]
    %v143 = vld [vmem:[#allocation5 + $0x1d8] sm:$0xff]
    %v144 = vld [vmem:[#allocation5 + $0x1e0] sm:$0xff]
    %v145 = vld [vmem:[#allocation5 + $0x1e8] sm:$0xff]
    %v146 = vld [vmem:[#allocation5 + $0x1f0] sm:$0xff]
    %v147 = vld [vmem:[#allocation5 + $0x1f8] sm:$0xff]
    %v148 = vld [vmem:[#allocation5 + $0x200] sm:$0xff]
    %v149 = vld [vmem:[#allocation5 + $0x208] sm:$0xff]
    %v150 = vld [vmem:[#allocation5 + $0x210] sm:$0xff]
    %v151 = vld [vmem:[#allocation5 + $0x218] sm:$0xff]
    %v152 = vld [vmem:[#allocation5 + $0x220] sm:$0xff]
    %v153 = vld [vmem:[#allocation5 + $0x228] sm:$0xff]
    %v154 = vld [vmem:[#allocation5 + $0x230] sm:$0xff]
    %v155 = vld [vmem:[#allocation5 + $0x238] sm:$0xff]
    %v156 = vld [vmem:[#allocation5 + $0x240] sm:$0xff]
    %v157 = vld [vmem:[#allocation5 + $0x248] sm:$0xff]
    %v158 = vld [vmem:[#allocation5 + $0x250] sm:$0xff]
    %v159 = vld [vmem:[#allocation5 + $0x258] sm:$0xff]
    %v160 = vld [vmem:[#allocation5 + $0x260] sm:$0xff]
    %v161 = vld [vmem:[#allocation5 + $0x268] sm:$0xff]
    %v162 = vld [vmem:[#allocation5 + $0x270] sm:$0xff]
    %v163 = vld [vmem:[#allocation5 + $0x278] sm:$0xff]
    %v164 = vld [vmem:[#allocation5 + $0x280] sm:$0xff]
    %v165 = vld [vmem:[#allocation5 + $0x288] sm:$0xff]
    %v166 = vld [vmem:[#allocation5 + $0x290] sm:$0xff]
    %v167 = vld [vmem:[#allocation5 + $0x298] sm:$0xff]
    %v168 = vld [vmem:[#allocation5 + $0x2a0] sm:$0xff]
    %v169 = vld [vmem:[#allocation5 + $0x2a8] sm:$0xff]
    %v170 = vld [vmem:[#allocation5 + $0x2b0] sm:$0xff]
    %v171 = vld [vmem:[#allocation5 + $0x2b8] sm:$0xff]
    %v172 = vld [vmem:[#allocation5 + $0x2c0] sm:$0xff]
    %v173 = vld [vmem:[#allocation5 + $0x2c8] sm:$0xff]
    %v174 = vld [vmem:[#allocation5 + $0x2d0] sm:$0xff]
    %v175 = vld [vmem:[#allocation5 + $0x2d8] sm:$0xff]
    %v176 = vld [vmem:[#allocation5 + $0x2e0] sm:$0xff]
    %v177 = vld [vmem:[#allocation5 + $0x2e8] sm:$0xff]
    %v178 = vld [vmem:[#allocation5 + $0x2f0] sm:$0xff]
    %v179 = vld [vmem:[#allocation5 + $0x2f8] sm:$0xff]
    %v180 = vld [vmem:[#allocation5 + $0x300] sm:$0xff]
    %v181 = vld [vmem:[#allocation5 + $0x308] sm:$0xff]
    %v182 = vld [vmem:[#allocation5 + $0x310] sm:$0xff]
    %v183 = vld [vmem:[#allocation5 + $0x318] sm:$0xff]
    %v184 = vld [vmem:[#allocation5 + $0x320] sm:$0xff]
    %v185 = vld [vmem:[#allocation5 + $0x328] sm:$0xff]
    %v186 = vld [vmem:[#allocation5 + $0x330] sm:$0xff]
    %v187 = vld [vmem:[#allocation5 + $0x338] sm:$0xff]
    %v188 = vld [vmem:[#allocation5 + $0x340] sm:$0xff]
    %v189 = vld [vmem:[#allocation5 + $0x348] sm:$0xff]
    %v190 = vld [vmem:[#allocation5 + $0x350] sm:$0xff]
    %v191 = vld [vmem:[#allocation5 + $0x358] sm:$0xff]
    %v192 = vld [vmem:[#allocation5 + $0x360] sm:$0xff]
    %v193 = vld [vmem:[#allocation5 + $0x368] sm:$0xff]
    %v194 = vld [vmem:[#allocation5 + $0x370] sm:$0xff]
    %v195 = vld [vmem:[#allocation5 + $0x378] sm:$0xff]
    %v196 = vld [vmem:[#allocation5 + $0x380] sm:$0xff]
    %v197 = vld [vmem:[#allocation5 + $0x388] sm:$0xff]
    %v198 = vld [vmem:[#allocation5 + $0x390] sm:$0xff]
    %v199 = vld [vmem:[#allocation5 + $0x398] sm:$0xff]
    %v200 = vld [vmem:[#allocation5 + $0x3a0] sm:$0xff]
    %v201 = vld [vmem:[#allocation5 + $0x3a8] sm:$0xff]
    %v202 = vld [vmem:[#allocation5 + $0x3b0] sm:$0xff]
    %v203 = vld [vmem:[#allocation5 + $0x3b8] sm:$0xff]
    %v204 = vld [vmem:[#allocation5 + $0x3c0] sm:$0xff]
    %v205 = vld [vmem:[#allocation5 + $0x3c8] sm:$0xff]
    %v206 = vld [vmem:[#allocation5 + $0x3d0] sm:$0xff]
    %v207 = vld [vmem:[#allocation5 + $0x3d8] sm:$0xff]
    %v208 = vld [vmem:[#allocation5 + $0x3e0] sm:$0xff]
    %v209 = vld [vmem:[#allocation5 + $0x3e8] sm:$0xff]
    %v210 = vld [vmem:[#allocation5 + $0x3f0] sm:$0xff]
    %v211 = vld [vmem:[#allocation5 + $0x3f8] sm:$0xff]
    %v212 = vld [vmem:[%s4] sm:$0x1]
    %v214 = vlaneseq
    %v215 = vshrl.u32 %v214, 7
    %v216 = vsub.s32 0, %v215
    %v217 = vrot.slane %v212, %v216
    %v227 = vcombine.low %v76, %v78
    %v228 = vcombine.high %v76, %v78
    %v229 = vcombine.low %v80, %v82
    %v230 = vcombine.high %v80, %v82
    %v232 = vunpack.c.l.s4 1983009808
    %v233 = vunpack.c.0.s8 %v232
    %v234 = vlaneseq
    %v235 = vshrl.u32 %v234, 7
    %v236 = vsub.s32 %v233, %v235
    %v237 = vrot.slane %v227, %v236
    %v239 = vunpack.c.l.s4 1983009808
    %v240 = vunpack.c.0.s8 %v239
    %v241 = vlaneseq
    %v242 = vshrl.u32 %v241, 7
    %v243 = vsub.s32 %v240, %v242
    %v244 = vrot.slane %v228, %v243
    %v246 = vunpack.c.l.s4 1983009808
    %v247 = vunpack.c.0.s8 %v246
    %v248 = vlaneseq
    %v249 = vshrl.u32 %v248, 7
    %v250 = vsub.s32 %v247, %v249
    %v251 = vrot.slane %v229, %v250
    %v253 = vunpack.c.l.s4 1983009808
    %v254 = vunpack.c.0.s8 %v253
    %v255 = vlaneseq
    %v256 = vshrl.u32 %v255, 7
    %v257 = vsub.s32 %v254, %v256
    %v258 = vrot.slane %v230, %v257
    %v259 = vcombine.low %v237, %v251
    %v260 = vcombine.high %v237, %v251
    %v261 = vcombine.low %v244, %v258
    %v262 = vcombine.high %v244, %v258
    %v263 = vcombine.low %v77, %v79
    %v264 = vcombine.high %v77, %v79
    %v265 = vcombine.low %v81, %v83
    %v266 = vcombine.high %v81, %v83
    %v268 = vunpack.c.l.s4 1983009808
    %v269 = vunpack.c.0.s8 %v268
    %v270 = vlaneseq
    %v271 = vshrl.u32 %v270, 7
    %v272 = vsub.s32 %v269, %v271
    %v273 = vrot.slane %v263, %v272
    %v275 = vunpack.c.l.s4 1983009808
    %v276 = vunpack.c.0.s8 %v275
    %v277 = vlaneseq
    %v278 = vshrl.u32 %v277, 7
    %v279 = vsub.s32 %v276, %v278
    %v280 = vrot.slane %v264, %v279
    %v282 = vunpack.c.l.s4 1983009808
    %v283 = vunpack.c.0.s8 %v282
    %v284 = vlaneseq
    %v285 = vshrl.u32 %v284, 7
    %v286 = vsub.s32 %v283, %v285
    %v287 = vrot.slane %v265, %v286
    %v289 = vunpack.c.l.s4 1983009808
    %v290 = vunpack.c.0.s8 %v289
    %v291 = vlaneseq
    %v292 = vshrl.u32 %v291, 7
    %v293 = vsub.s32 %v290, %v292
    %v294 = vrot.slane %v266, %v293
    %v295 = vcombine.low %v273, %v287
    %v296 = vcombine.high %v273, %v287
    %v297 = vcombine.low %v280, %v294
    %v298 = vcombine.high %v280, %v294
    %307 = vmatprep.subr.mxu0 0.0
    %308 = vmatpush1.msra.mxu0 %v84
    %309 = vmatprep.subr.mxu0 0.0
    %310 = vmatpush1.msra.mxu0 %v85
    %311 = vmatprep.subr.mxu0 0.0
    %312 = vmatpush1.msra.mxu0 %v86
    %313 = vmatprep.subr.mxu0 0.0
    %314 = vmatpush1.msra.mxu0 %v87
    %315 = vmatprep.subr.mxu0 0.0
    %316 = vmatpush1.msra.mxu0 %v88
    %317 = vmatprep.subr.mxu0 0.0
    %318 = vmatpush1.msra.mxu0 %v89
    %319 = vmatprep.subr.mxu0 0.0
    %320 = vmatpush1.msra.mxu0 %v90
    %321 = vmatprep.subr.mxu0 0.0
    %322 = vmatpush1.msra.mxu0 %v91
    %323 = vmatprep.subr.mxu0 0.0
    %324 = vmatpush1.msra.mxu0 %v92
    %325 = vmatprep.subr.mxu0 0.0
    %326 = vmatpush1.msra.mxu0 %v93
    %327 = vmatprep.subr.mxu0 0.0
    %328 = vmatpush1.msra.mxu0 %v94
    %329 = vmatprep.subr.mxu0 0.0
    %330 = vmatpush1.msra.mxu0 %v95
    %331 = vmatprep.subr.mxu0 0.0
    %332 = vmatpush1.msra.mxu0 %v96
    %333 = vmatprep.subr.mxu0 0.0
    %334 = vmatpush1.msra.mxu0 %v97
    %335 = vmatprep.subr.mxu0 0.0
    %336 = vmatpush1.msra.mxu0 %v98
    %337 = vmatprep.subr.mxu0 0.0
    %338 = vmatpush1.msra.mxu0 %v99
    %339 = vmatprep.subr.mxu0 0.0
    %340 = vmatpush1.msra.mxu0 %v100
    %341 = vmatprep.subr.mxu0 0.0
    %342 = vmatpush1.msra.mxu0 %v101
    %343 = vmatprep.subr.mxu0 0.0
    %344 = vmatpush1.msra.mxu0 %v102
    %345 = vmatprep.subr.mxu0 0.0
    %346 = vmatpush1.msra.mxu0 %v103
    %347 = vmatprep.subr.mxu0 0.0
    %348 = vmatpush1.msra.mxu0 %v104
    %349 = vmatprep.subr.mxu0 0.0
    %350 = vmatpush1.msra.mxu0 %v105
    %351 = vmatprep.subr.mxu0 0.0
    %352 = vmatpush1.msra.mxu0 %v106
    %353 = vmatprep.subr.mxu0 0.0
    %354 = vmatpush1.msra.mxu0 %v107
    %355 = vmatprep.subr.mxu0 0.0
    %356 = vmatpush1.msra.mxu0 %v108
    %357 = vmatprep.subr.mxu0 0.0
    %358 = vmatpush1.msra.mxu0 %v109
    %359 = vmatprep.subr.mxu0 0.0
    %360 = vmatpush1.msra.mxu0 %v110
    %361 = vmatprep.subr.mxu0 0.0
    %362 = vmatpush1.msra.mxu0 %v111
    %363 = vmatprep.subr.mxu0 0.0
    %364 = vmatpush1.msra.mxu0 %v112
    %365 = vmatprep.subr.mxu0 0.0
    %366 = vmatpush1.msra.mxu0 %v113
    %367 = vmatprep.subr.mxu0 0.0
    %368 = vmatpush1.msra.mxu0 %v114
    %369 = vmatprep.subr.mxu0 0.0
    %370 = vmatpush1.msra.mxu0 %v115
    %371 = vmatprep.mubr.f32.mxu0 %v260
    %372 = vmatmul.mubr.f32.gmra.mrb[0].mxu0 %v259
    %v373 = vpop.f32.mrb[0].mxu0
    %v374 = vadd.f32 %v217, %v373
    %v375 = vpop.f32.mrb[0].mxu0
    %376 = vdwg.mxu0
    %377 = vmatprep.subr.mxu0 0.0
    %378 = vmatpush1.msra.mxu0 %v116
    %379 = vmatprep.subr.mxu0 0.0
    %380 = vmatpush1.msra.mxu0 %v117
    %381 = vmatprep.subr.mxu0 0.0
    %382 = vmatpush1.msra.mxu0 %v118
    %383 = vmatprep.subr.mxu0 0.0
    %384 = vmatpush1.msra.mxu0 %v119
    %385 = vmatprep.subr.mxu0 0.0
    %386 = vmatpush1.msra.mxu0 %v120
    %387 = vmatprep.subr.mxu0 0.0
    %388 = vmatpush1.msra.mxu0 %v121
    %389 = vmatprep.subr.mxu0 0.0
    %390 = vmatpush1.msra.mxu0 %v122
    %391 = vmatprep.subr.mxu0 0.0
    %392 = vmatpush1.msra.mxu0 %v123
    %393 = vmatprep.subr.mxu0 0.0
    %394 = vmatpush1.msra.mxu0 %v124
    %395 = vmatprep.subr.mxu0 0.0
    %396 = vmatpush1.msra.mxu0 %v125
    %397 = vmatprep.subr.mxu0 0.0
    %398 = vmatpush1.msra.mxu0 %v126
    %399 = vmatprep.subr.mxu0 0.0
    %400 = vmatpush1.msra.mxu0 %v127
    %401 = vmatprep.subr.mxu0 0.0
    %402 = vmatpush1.msra.mxu0 %v128
    %403 = vmatprep.subr.mxu0 0.0
    %404 = vmatpush1.msra.mxu0 %v129
    %405 = vmatprep.subr.mxu0 0.0
    %406 = vmatpush1.msra.mxu0 %v130
    %407 = vmatprep.subr.mxu0 0.0
    %408 = vmatpush1.msra.mxu0 %v131
    %409 = vmatprep.subr.mxu0 0.0
    %410 = vmatpush1.msra.mxu0 %v132
    %411 = vmatprep.subr.mxu0 0.0
    %412 = vmatpush1.msra.mxu0 %v133
    %413 = vmatprep.subr.mxu0 0.0
    %414 = vmatpush1.msra.mxu0 %v134
    %415 = vmatprep.subr.mxu0 0.0
    %416 = vmatpush1.msra.mxu0 %v135
    %417 = vmatprep.subr.mxu0 0.0
    %418 = vmatpush1.msra.mxu0 %v136
    %419 = vmatprep.subr.mxu0 0.0
    %420 = vmatpush1.msra.mxu0 %v137
    %421 = vmatprep.subr.mxu0 0.0
    %422 = vmatpush1.msra.mxu0 %v138
    %423 = vmatprep.subr.mxu0 0.0
    %424 = vmatpush1.msra.mxu0 %v139
    %425 = vmatprep.subr.mxu0 0.0
    %426 = vmatpush1.msra.mxu0 %v140
    %427 = vmatprep.subr.mxu0 0.0
    %428 = vmatpush1.msra.mxu0 %v141
    %429 = vmatprep.subr.mxu0 0.0
    %430 = vmatpush1.msra.mxu0 %v142
    %431 = vmatprep.subr.mxu0 0.0
    %432 = vmatpush1.msra.mxu0 %v143
    %433 = vmatprep.subr.mxu0 0.0
    %434 = vmatpush1.msra.mxu0 %v144
    %435 = vmatprep.subr.mxu0 0.0
    %436 = vmatpush1.msra.mxu0 %v145
    %437 = vmatprep.subr.mxu0 0.0
    %438 = vmatpush1.msra.mxu0 %v146
    %439 = vmatprep.subr.mxu0 0.0
    %440 = vmatpush1.msra.mxu0 %v147
    %441 = vmatprep.mubr.f32.mxu0 %v262
    %442 = vmatmul.mubr.f32.gmra.mrb[0].mxu0 %v261
    %v443 = vpop.f32.mrb[0].mxu0
    %v444 = vadd.f32 %v374, %v443
    %v445 = vpop.f32.mrb[0].mxu0
    %446 = vdwg.mxu0
    %447 = vmatprep.subr.mxu0 0.0
    %448 = vmatpush1.msra.mxu0 %v148
    %449 = vmatprep.subr.mxu0 0.0
    %450 = vmatpush1.msra.mxu0 %v149
    %451 = vmatprep.subr.mxu0 0.0
    %452 = vmatpush1.msra.mxu0 %v150
    %453 = vmatprep.subr.mxu0 0.0
    %454 = vmatpush1.msra.mxu0 %v151
    %455 = vmatprep.subr.mxu0 0.0
    %456 = vmatpush1.msra.mxu0 %v152
    %457 = vmatprep.subr.mxu0 0.0
    %458 = vmatpush1.msra.mxu0 %v153
    %459 = vmatprep.subr.mxu0 0.0
    %460 = vmatpush1.msra.mxu0 %v154
    %461 = vmatprep.subr.mxu0 0.0
    %462 = vmatpush1.msra.mxu0 %v155
    %463 = vmatprep.subr.mxu0 0.0
    %464 = vmatpush1.msra.mxu0 %v156
    %465 = vmatprep.subr.mxu0 0.0
    %466 = vmatpush1.msra.mxu0 %v157
    %467 = vmatprep.subr.mxu0 0.0
    %468 = vmatpush1.msra.mxu0 %v158
    %469 = vmatprep.subr.mxu0 0.0
    %470 = vmatpush1.msra.mxu0 %v159
    %471 = vmatprep.subr.mxu0 0.0
    %472 = vmatpush1.msra.mxu0 %v160
    %473 = vmatprep.subr.mxu0 0.0
    %474 = vmatpush1.msra.mxu0 %v161
    %475 = vmatprep.subr.mxu0 0.0
    %476 = vmatpush1.msra.mxu0 %v162
    %477 = vmatprep.subr.mxu0 0.0
    %478 = vmatpush1.msra.mxu0 %v163
    %479 = vmatprep.subr.mxu0 0.0
    %480 = vmatpush1.msra.mxu0 %v164
    %481 = vmatprep.subr.mxu0 0.0
    %482 = vmatpush1.msra.mxu0 %v165
    %483 = vmatprep.subr.mxu0 0.0
    %484 = vmatpush1.msra.mxu0 %v166
    %485 = vmatprep.subr.mxu0 0.0
    %486 = vmatpush1.msra.mxu0 %v167
    %487 = vmatprep.subr.mxu0 0.0
    %488 = vmatpush1.msra.mxu0 %v168
    %489 = vmatprep.subr.mxu0 0.0
    %490 = vmatpush1.msra.mxu0 %v169
    %491 = vmatprep.subr.mxu0 0.0
    %492 = vmatpush1.msra.mxu0 %v170
    %493 = vmatprep.subr.mxu0 0.0
    %494 = vmatpush1.msra.mxu0 %v171
    %495 = vmatprep.subr.mxu0 0.0
    %496 = vmatpush1.msra.mxu0 %v172
    %497 = vmatprep.subr.mxu0 0.0
    %498 = vmatpush1.msra.mxu0 %v173
    %499 = vmatprep.subr.mxu0 0.0
    %500 = vmatpush1.msra.mxu0 %v174
    %501 = vmatprep.subr.mxu0 0.0
    %502 = vmatpush1.msra.mxu0 %v175
    %503 = vmatprep.subr.mxu0 0.0
    %504 = vmatpush1.msra.mxu0 %v176
    %505 = vmatprep.subr.mxu0 0.0
    %506 = vmatpush1.msra.mxu0 %v177
    %507 = vmatprep.subr.mxu0 0.0
    %508 = vmatpush1.msra.mxu0 %v178
    %509 = vmatprep.subr.mxu0 0.0
    %510 = vmatpush1.msra.mxu0 %v179
    %511 = vmatprep.mubr.f32.mxu0 %v296
    %512 = vmatmul.mubr.f32.gmra.mrb[0].mxu0 %v295
    %v513 = vpop.f32.mrb[0].mxu0
    %v514 = vadd.f32 %v444, %v513
    %v515 = vpop.f32.mrb[0].mxu0
    %516 = vdwg.mxu0
    %517 = vmatprep.subr.mxu0 0.0
    %518 = vmatpush1.msra.mxu0 %v180
    %519 = vmatprep.subr.mxu0 0.0
    %520 = vmatpush1.msra.mxu0 %v181
    %521 = vmatprep.subr.mxu0 0.0
    %522 = vmatpush1.msra.mxu0 %v182
    %523 = vmatprep.subr.mxu0 0.0
    %524 = vmatpush1.msra.mxu0 %v183
    %525 = vmatprep.subr.mxu0 0.0
    %526 = vmatpush1.msra.mxu0 %v184
    %527 = vmatprep.subr.mxu0 0.0
    %528 = vmatpush1.msra.mxu0 %v185
    %529 = vmatprep.subr.mxu0 0.0
    %530 = vmatpush1.msra.mxu0 %v186
    %531 = vmatprep.subr.mxu0 0.0
    %532 = vmatpush1.msra.mxu0 %v187
    %533 = vmatprep.subr.mxu0 0.0
    %534 = vmatpush1.msra.mxu0 %v188
    %535 = vmatprep.subr.mxu0 0.0
    %536 = vmatpush1.msra.mxu0 %v189
    %537 = vmatprep.subr.mxu0 0.0
    %538 = vmatpush1.msra.mxu0 %v190
    %539 = vmatprep.subr.mxu0 0.0
    %540 = vmatpush1.msra.mxu0 %v191
    %541 = vmatprep.subr.mxu0 0.0
    %542 = vmatpush1.msra.mxu0 %v192
    %543 = vmatprep.subr.mxu0 0.0
    %544 = vmatpush1.msra.mxu0 %v193
    %545 = vmatprep.subr.mxu0 0.0
    %546 = vmatpush1.msra.mxu0 %v194
    %547 = vmatprep.subr.mxu0 0.0
    %548 = vmatpush1.msra.mxu0 %v195
    %549 = vmatprep.subr.mxu0 0.0
    %550 = vmatpush1.msra.mxu0 %v196
    %551 = vmatprep.subr.mxu0 0.0
    %552 = vmatpush1.msra.mxu0 %v197
    %553 = vmatprep.subr.mxu0 0.0
    %554 = vmatpush1.msra.mxu0 %v198
    %555 = vmatprep.subr.mxu0 0.0
    %556 = vmatpush1.msra.mxu0 %v199
    %557 = vmatprep.subr.mxu0 0.0
    %558 = vmatpush1.msra.mxu0 %v200
    %559 = vmatprep.subr.mxu0 0.0
    %560 = vmatpush1.msra.mxu0 %v201
    %561 = vmatprep.subr.mxu0 0.0
    %562 = vmatpush1.msra.mxu0 %v202
    %563 = vmatprep.subr.mxu0 0.0
    %564 = vmatpush1.msra.mxu0 %v203
    %565 = vmatprep.subr.mxu0 0.0
    %566 = vmatpush1.msra.mxu0 %v204
    %567 = vmatprep.subr.mxu0 0.0
    %568 = vmatpush1.msra.mxu0 %v205
    %569 = vmatprep.subr.mxu0 0.0
    %570 = vmatpush1.msra.mxu0 %v206
    %571 = vmatprep.subr.mxu0 0.0
    %572 = vmatpush1.msra.mxu0 %v207
    %573 = vmatprep.subr.mxu0 0.0
    %574 = vmatpush1.msra.mxu0 %v208
    %575 = vmatprep.subr.mxu0 0.0
    %576 = vmatpush1.msra.mxu0 %v209
    %577 = vmatprep.subr.mxu0 0.0
    %578 = vmatpush1.msra.mxu0 %v210
    %579 = vmatprep.subr.mxu0 0.0
    %580 = vmatpush1.msra.mxu0 %v211
    %581 = vmatprep.mubr.f32.mxu0 %v298
    %582 = vmatmul.mubr.f32.gmra.mrb[0].mxu0 %v297
    %v583 = vpop.f32.mrb[0].mxu0
    %v584 = vadd.f32 %v514, %v583
    %v585 = vpop.f32.mrb[0].mxu0
    %586 = vdwg.mxu0
    %v587 = vmax.f32 %v584, 0.0
    %v588 = vld [vmem:[#allocation7] sm:$0xff]
    %v589 = vld [vmem:[#allocation7 + $0x8] sm:$0xff]
    %v590 = vld [vmem:[#allocation7 + $0x10] sm:$0xff]
    %v591 = vld [vmem:[#allocation7 + $0x18] sm:$0xff]
    %v592 = vld [vmem:[#allocation7 + $0x20] sm:$0xff]
    %v593 = vld [vmem:[#allocation7 + $0x28] sm:$0xff]
    %v594 = vld [vmem:[#allocation7 + $0x30] sm:$0xff]
    %v595 = vld [vmem:[#allocation7 + $0x38] sm:$0xff]
    %v596 = vld [vmem:[#allocation7 + $0x40] sm:$0xff]
    %v597 = vld [vmem:[#allocation7 + $0x48] sm:$0xff]
    %v598 = vld [vmem:[#allocation7 + $0x50] sm:$0xff]
    %v599 = vld [vmem:[#allocation7 + $0x58] sm:$0xff]
    %v600 = vld [vmem:[#allocation7 + $0x60] sm:$0xff]
    %v601 = vld [vmem:[#allocation7 + $0x68] sm:$0xff]
    %v602 = vld [vmem:[#allocation7 + $0x70] sm:$0xff]
    %v603 = vld [vmem:[#allocation7 + $0x78] sm:$0xff]
    %v604 = vld [vmem:[%s4 + $0x1] sm:$0x1]
    %v606 = vlaneseq
    %v607 = vshrl.u32 %v606, 7
    %v608 = vsub.s32 0, %v607
    %v609 = vrot.slane %v604, %v608
    %611 = vmatprep.subr.mxu0 0.0
    %612 = vmatpush1.msra.mxu0 %v588
    %613 = vmatprep.subr.mxu0 0.0
    %614 = vmatpush1.msra.mxu0 %v589
    %615 = vmatprep.subr.mxu0 0.0
    %616 = vmatpush1.msra.mxu0 %v590
    %617 = vmatprep.subr.mxu0 0.0
    %618 = vmatpush1.msra.mxu0 %v591
    %619 = vmatprep.subr.mxu0 0.0
    %620 = vmatpush1.msra.mxu0 %v592
    %621 = vmatprep.subr.mxu0 0.0
    %622 = vmatpush1.msra.mxu0 %v593
    %623 = vmatprep.subr.mxu0 0.0
    %624 = vmatpush1.msra.mxu0 %v594
    %625 = vmatprep.subr.mxu0 0.0
    %626 = vmatpush1.msra.mxu0 %v595
    %627 = vmatprep.subr.mxu0 0.0
    %628 = vmatpush1.msra.mxu0 %v596
    %629 = vmatprep.subr.mxu0 0.0
    %630 = vmatpush1.msra.mxu0 %v597
    %631 = vmatprep.subr.mxu0 0.0
    %632 = vmatpush1.msra.mxu0 %v598
    %633 = vmatprep.subr.mxu0 0.0
    %634 = vmatpush1.msra.mxu0 %v599
    %635 = vmatprep.subr.mxu0 0.0
    %636 = vmatpush1.msra.mxu0 %v600
    %637 = vmatprep.subr.mxu0 0.0
    %638 = vmatpush1.msra.mxu0 %v601
    %639 = vmatprep.subr.mxu0 0.0
    %640 = vmatpush1.msra.mxu0 %v602
    %641 = vmatprep.subr.mxu0 0.0
    %642 = vmatpush1.msra.mxu0 %v603
    %643 = vmatprep.subr.mxu0 0.0
    %644 = vmatpush1.msra.mxu0 0.0
    %645 = vmatprep.subr.mxu0 0.0
    %646 = vmatpush1.msra.mxu0 0.0
    %647 = vmatprep.subr.mxu0 0.0
    %648 = vmatpush1.msra.mxu0 0.0
    %649 = vmatprep.subr.mxu0 0.0
    %650 = vmatpush1.msra.mxu0 0.0
    %651 = vmatprep.subr.mxu0 0.0
    %652 = vmatpush1.msra.mxu0 0.0
    %653 = vmatprep.subr.mxu0 0.0
    %654 = vmatpush1.msra.mxu0 0.0
    %655 = vmatprep.subr.mxu0 0.0
    %656 = vmatpush1.msra.mxu0 0.0
    %657 = vmatprep.subr.mxu0 0.0
    %658 = vmatpush1.msra.mxu0 0.0
    %659 = vmatprep.subr.mxu0 0.0
    %660 = vmatpush1.msra.mxu0 0.0
    %661 = vmatprep.subr.mxu0 0.0
    %662 = vmatpush1.msra.mxu0 0.0
    %663 = vmatprep.subr.mxu0 0.0
    %664 = vmatpush1.msra.mxu0 0.0
    %665 = vmatprep.subr.mxu0 0.0
    %666 = vmatpush1.msra.mxu0 0.0
    %667 = vmatprep.subr.mxu0 0.0
    %668 = vmatpush1.msra.mxu0 0.0
    %669 = vmatprep.subr.mxu0 0.0
    %670 = vmatpush1.msra.mxu0 0.0
    %671 = vmatprep.subr.mxu0 0.0
    %672 = vmatpush1.msra.mxu0 0.0
    %673 = vmatprep.subr.mxu0 0.0
    %674 = vmatpush1.msra.mxu0 0.0
    %675 = vmatprep.mubr.f32.mxu0 0.0
    %676 = vmatmul.mubr.f32.gmra.mrb[0].mxu0 %v587
    %v677 = vpop.f32.mrb[0].mxu0
    %v678 = vadd.f32 %v609, %v677
    %v679 = vpop.f32.mrb[0].mxu0
    %680 = vdwg.mxu0
    %v681 = vmax.f32 %v678, 0.0
    %v682 = vld [vmem:[#allocation8] sm:$0xff]
    %v683 = vld [vmem:[#allocation8 + $0x8] sm:$0xff]
    %v684 = vld [vmem:[#allocation8 + $0x10] sm:$0xff]
    %v685 = vld [vmem:[#allocation8 + $0x18] sm:$0xff]
    %v686 = vld [vmem:[#allocation8 + $0x20] sm:$0xff]
    %v687 = vld [vmem:[#allocation8 + $0x28] sm:$0xff]
    %v688 = vld [vmem:[#allocation8 + $0x30] sm:$0xff]
    %v689 = vld [vmem:[#allocation8 + $0x38] sm:$0xff]
    %v690 = vld [vmem:[#allocation8 + $0x40] sm:$0xff]
    %v691 = vld [vmem:[#allocation8 + $0x48] sm:$0xff]
    %v692 = vld [vmem:[#allocation8 + $0x50] sm:$0xff]
    %v693 = vld [vmem:[#allocation8 + $0x58] sm:$0xff]
    %v694 = vld [vmem:[#allocation8 + $0x60] sm:$0xff]
    %v695 = vld [vmem:[#allocation8 + $0x68] sm:$0xff]
    %v696 = vld [vmem:[#allocation8 + $0x70] sm:$0xff]
    %v697 = vld [vmem:[#allocation8 + $0x78] sm:$0xff]
    %v698 = vld [vmem:[%s4 + $0x2] sm:$0x1]
    %v700 = vlaneseq
    %v701 = vshrl.u32 %v700, 7
    %v702 = vsub.s32 0, %v701
    %v703 = vrot.slane %v698, %v702
    %705 = vmatprep.subr.mxu0 0.0
    %706 = vmatpush1.msra.mxu0 %v682
    %707 = vmatprep.subr.mxu0 0.0
    %708 = vmatpush1.msra.mxu0 %v683
    %709 = vmatprep.subr.mxu0 0.0
    %710 = vmatpush1.msra.mxu0 %v684
    %711 = vmatprep.subr.mxu0 0.0
    %712 = vmatpush1.msra.mxu0 %v685
    %713 = vmatprep.subr.mxu0 0.0
    %714 = vmatpush1.msra.mxu0 %v686
    %715 = vmatprep.subr.mxu0 0.0
    %716 = vmatpush1.msra.mxu0 %v687
    %717 = vmatprep.subr.mxu0 0.0
    %718 = vmatpush1.msra.mxu0 %v688
    %719 = vmatprep.subr.mxu0 0.0
    %720 = vmatpush1.msra.mxu0 %v689
    %721 = vmatprep.subr.mxu0 0.0
    %722 = vmatpush1.msra.mxu0 %v690
    %723 = vmatprep.subr.mxu0 0.0
    %724 = vmatpush1.msra.mxu0 %v691
    %725 = vmatprep.subr.mxu0 0.0
    %726 = vmatpush1.msra.mxu0 %v692
    %727 = vmatprep.subr.mxu0 0.0
    %728 = vmatpush1.msra.mxu0 %v693
    %729 = vmatprep.subr.mxu0 0.0
    %730 = vmatpush1.msra.mxu0 %v694
    %731 = vmatprep.subr.mxu0 0.0
    %732 = vmatpush1.msra.mxu0 %v695
    %733 = vmatprep.subr.mxu0 0.0
    %734 = vmatpush1.msra.mxu0 %v696
    %735 = vmatprep.subr.mxu0 0.0
    %736 = vmatpush1.msra.mxu0 %v697
    %737 = vmatprep.subr.mxu0 0.0
    %738 = vmatpush1.msra.mxu0 0.0
    %739 = vmatprep.subr.mxu0 0.0
    %740 = vmatpush1.msra.mxu0 0.0
    %741 = vmatprep.subr.mxu0 0.0
    %742 = vmatpush1.msra.mxu0 0.0
    %743 = vmatprep.subr.mxu0 0.0
    %744 = vmatpush1.msra.mxu0 0.0
    %745 = vmatprep.subr.mxu0 0.0
    %746 = vmatpush1.msra.mxu0 0.0
    %747 = vmatprep.subr.mxu0 0.0
    %748 = vmatpush1.msra.mxu0 0.0
    %749 = vmatprep.subr.mxu0 0.0
    %750 = vmatpush1.msra.mxu0 0.0
    %751 = vmatprep.subr.mxu0 0.0
    %752 = vmatpush1.msra.mxu0 0.0
    %753 = vmatprep.subr.mxu0 0.0
    %754 = vmatpush1.msra.mxu0 0.0
    %755 = vmatprep.subr.mxu0 0.0
    %756 = vmatpush1.msra.mxu0 0.0
    %757 = vmatprep.subr.mxu0 0.0
    %758 = vmatpush1.msra.mxu0 0.0
    %759 = vmatprep.subr.mxu0 0.0
    %760 = vmatpush1.msra.mxu0 0.0
    %761 = vmatprep.subr.mxu0 0.0
    %762 = vmatpush1.msra.mxu0 0.0
    %763 = vmatprep.subr.mxu0 0.0
    %764 = vmatpush1.msra.mxu0 0.0
    %765 = vmatprep.subr.mxu0 0.0
    %766 = vmatpush1.msra.mxu0 0.0
    %767 = vmatprep.subr.mxu0 0.0
    %768 = vmatpush1.msra.mxu0 0.0
    %769 = vmatprep.mubr.f32.mxu0 0.0
    %770 = vmatmul.mubr.f32.gmra.mrb[0].mxu0 %v681
    %v771 = vpop.f32.mrb[0].mxu0
    %v772 = vadd.f32 %v703, %v771
    %v773 = vpop.f32.mrb[0].mxu0
    %774 = vdwg.mxu0
    %775 = vmax.xlane.f32.xlu0 %v772
    %v776 = vpop.xlane.xlu0 %775
    %v777 = vsub.f32 %v772, %v776
    %v778 = vmul.f32 %v777, 1.442695
    %v779 = vpow.pop %v778
    %780 = vadd.xlane.f32.xlu0 %v779
    %v781 = vpop.xlane.xlu0 %780
    %v782 = vrcp.pop %v781
    %v783 = vmul.f32 %v781, %v782
    %v784 = vsub.f32 2.0, %v783
    %v785 = vmul.f32 %v782, %v784
    %v786 = vmul.f32 %v779, %v785
    %787 = vst [vmem:[#allocation10] sm:$0xff] %v786
    // Predicated region
    $region38: #{tpu_custom_call.1} parent=1 // pred_check
      _
    $region39: #{tpu_custom_call.1} parent=1 // pred_check_branch
      %789 = sbr.rel (0) target = $region41
    $region40: #{tpu_custom_call.1} parent=1 // pred_region
      %s791 = ssub.s32 128, 128
      %792 = vsyncadd [#allocation4], %s791
      %s794 = sshll.u32 [#allocation10], 4
      %s795 = int_to_ptr.vmem [resolvable:$true] %s794
      %797 = dma.vmem_to_hbm [thread:$0]  %s795, 128, %s5, [#allocation4]
    $region41: #{tpu_custom_call.1} parent=1 // pred_fallthru
      _
    // Predicated region
    $region42: #{tpu_custom_call.1} parent=1 // pred_check
      _
    $region43: #{tpu_custom_call.1} parent=1 // pred_check_branch
      %799 = sbr.rel (0) target = $region45
    $region44: #{tpu_custom_call.1} parent=1 // pred_region
      %800 = dma.done [#allocation4], 128
    $region45: #{tpu_custom_call.1} parent=1 // pred_fallthru
      _
    %801 = vsyncpa [#allocation3], 1
    %802 = vsyncpa [#allocation6], 1
    %803 = vsyncpa [#allocation9], 1
    %804 = vsyncpa [#allocation4], 1

</llo_original>
